<compile_context>
chip_gen: v7x
topology: tpu7x:2x2x1
jax: 0.10.0
libtpu: 0.0.40
codegen_flags: <defaults>
</compile_context>

<pallas_src>
import jax
import jax.numpy as jnp
from jax import lax
from jax.experimental import pallas as pl
from jax.experimental.pallas import tpu as pltpu

# ----------------------------- configuration --------------------------------
BATCH = 2
SEQ = 8                        # N (number of frames / tokens)
FEAT = 32                      # feature_size
EXP = 2                        # expansion
GROUPS = 8                     # groups
CLUSTER = 16                   # cluster_size
OUT = 64                       # output_size
NEWF = EXP * FEAT // GROUPS    # new_feature_size = 8
EF = EXP * FEAT                # expanded feature size = 64
GC = GROUPS * CLUSTER          # 128
NG = SEQ * GROUPS              # 64
BN = BATCH * SEQ               # 16
COMB = 2 * GC                  # 256: cols [0:GC)=Wc, [GC:GC+GROUPS)=Wa, rest zero-pad


# ------------------------------ fused kernel ---------------------------------
def nextvlad_kernel(x_ref, mask_ref, we_ref, be_ref, wcomb_ref, bcomb_ref,
                    cw_ref, wfc_ref, bfc_ref, out_ref,
                    p_buf, r_buf, vflat_ref):
    # ---- projections: expansion + fused (cluster | attention) matmul (MXU) ----
    x = x_ref[...]                                                   # [BN, F]
    expanded = jnp.dot(x, we_ref[...],
                       preferred_element_type=jnp.float32) + be_ref[...]   # [BN, EF]
    comb = jnp.dot(expanded, wcomb_ref[...],
                   preferred_element_type=jnp.float32) + bcomb_ref[...]    # [BN, 256]
    act = comb[:, :GC]                                               # [BN, GC]
    att = jax.nn.sigmoid(comb[:, GC:GC + GROUPS]) * mask_ref[...]    # [BN, G]
    cw = cw_ref[...]                                                 # [NF, C]

    for b in range(BATCH):                          # B = 2, unrolled
        r0 = b * SEQ
        exp_b = expanded[r0:r0 + SEQ, :]            # [N, EF]
        act_b = act[r0:r0 + SEQ, :]                 # [N, GC]
        att_b = att[r0:r0 + SEQ, :]                 # [N, G]

        # per-group softmax (exact per-group max) + attention weighting; rows
        # are packed into [NG, C]/[NG, NF] VMEM buffers in (g, n) order — the
        # VLAD contraction and a_sum are invariant to the row ordering as long
        # as p_buf and r_buf use the same one.
        for g in range(GROUPS):                     # 8, unrolled
            a_g = act_b[:, g * CLUSTER:(g + 1) * CLUSTER]            # [N, C]
            m = jnp.max(a_g, axis=-1, keepdims=True)
            e = jnp.exp(a_g - m)
            p = e / jnp.sum(e, axis=-1, keepdims=True)
            p = p * att_b[:, g:g + 1]                                # [N, C]
            p_buf[g * SEQ:(g + 1) * SEQ, :] = p
            r_buf[g * SEQ:(g + 1) * SEQ, :] = exp_b[:, g * NEWF:(g + 1) * NEWF]

        p_all = p_buf[...]                          # [NG, C]
        r_all = r_buf[...]                          # [NG, NF]
        a_sum = jnp.sum(p_all, axis=0, keepdims=True)                # [1, C]

        # VLAD aggregation: contract the NG axis (dim 0 of both operands).
        vlad = lax.dot_general(r_all, p_all, (((0,), (0,)), ((), ())),
                               preferred_element_type=jnp.float32)   # [NF, C]
        vlad = vlad - a_sum * cw                                     # residual

        # L2 normalize over NF (torch dim=1); v/max(||v||,1e-12) == v*rsqrt(max(ss,1e-24))
        ss = jnp.sum(vlad * vlad, axis=0, keepdims=True)             # [1, C]
        vlad = vlad * lax.rsqrt(jnp.maximum(ss, 1e-24))

        # flatten [NF, C] into row b of the lane-dense [B, NF*C] FC input
        for f in range(NEWF):                       # 8, unrolled
            vflat_ref[b:b + 1, f * CLUSTER:(f + 1) * CLUSTER] = vlad[f:f + 1, :]

    # ---- final dense projection: one MXU matmul for the whole batch ----
    # TODO(synk): self.dropout skipped (identity in eval mode).
    out_ref[...] = jnp.dot(vflat_ref[...], wfc_ref[...],
                           preferred_element_type=jnp.float32) + bfc_ref[...]


# ------------------------------ host wrapper ---------------------------------
def nextvlad_pallas(x, mask, prm):
    B, N, F = x.shape
    x2d = x.reshape(B * N, F)
    mask2d = mask.reshape(B * N, 1)
    full = lambda shp: pl.BlockSpec(shp, lambda i: (0, 0))
    return pl.pallas_call(
        nextvlad_kernel,
        out_shape=jax.ShapeDtypeStruct((B, OUT), jnp.float32),
        grid=(1,),
        in_specs=[full((B * N, F)), full((B * N, 1)),
                  full(prm["We"].shape), full(prm["be"].shape),
                  full(prm["Wcomb"].shape), full(prm["bcomb"].shape),
                  full(prm["cw"].shape), full(prm["Wfc"].shape),
                  full(prm["bfc"].shape)],
        out_specs=full((B, OUT)),
        scratch_shapes=[pltpu.VMEM((NG, CLUSTER), jnp.float32),   # p_buf
                        pltpu.VMEM((NG, NEWF), jnp.float32),      # r_buf
                        pltpu.VMEM((B, NEWF * CLUSTER), jnp.float32)],  # vflat
        compiler_params=pltpu.CompilerParams(
            dimension_semantics=("arbitrary",)),
    )(x2d, mask2d, prm["We"], prm["be"], prm["Wcomb"], prm["bcomb"],
      prm["cw"], prm["Wfc"], prm["bfc"])


def prepare_params(prm):
    """Concatenate Wa/Wc (+bias) into one lane-aligned weight, done once."""
    Wcomb = jnp.zeros((EF, COMB), jnp.float32)
    Wcomb = Wcomb.at[:, :GC].set(prm["Wc"])
    Wcomb = Wcomb.at[:, GC:GC + GROUPS].set(prm["Wa"])
    bcomb = jnp.zeros((1, COMB), jnp.float32)
    bcomb = bcomb.at[:, GC:GC + GROUPS].set(prm["ba"])
    return {"We": prm["We"], "be": prm["be"], "Wcomb": Wcomb, "bcomb": bcomb,
            "cw": prm["cw"], "Wfc": prm["Wfc"], "bfc": prm["bfc"]}


# --------------------------- pure-JAX reference ------------------------------
def nextvlad_ref(x, mask, prm):
    B, N, _ = x.shape
    inputs = x @ prm["We"] + prm["be"]                              # [B,N,EF]
    attention = jax.nn.sigmoid(inputs @ prm["Wa"] + prm["ba"])      # [B,N,G]
    attention = attention * mask[..., None]
    attention = attention.reshape(B, N * GROUPS, 1)
    reshaped = inputs.reshape(-1, EF)
    activation = reshaped @ prm["Wc"]
    activation = activation.reshape(B, N * GROUPS, CLUSTER)
    activation = jax.nn.softmax(activation, axis=-1)
    activation = activation * attention
    a_sum = activation.sum(axis=-2, keepdims=True)                  # [B,1,C]
    a = a_sum * prm["cw"][None]                                     # [B,NF,C]
    activation_t = jnp.transpose(activation, (0, 2, 1))
    reshaped2 = inputs.reshape(B, N * GROUPS, NEWF)
    vlad = activation_t @ reshaped2                                 # [B,C,NF]
    vlad = jnp.transpose(vlad, (0, 2, 1))                           # [B,NF,C]
    vlad = vlad - a
    norm = jnp.sqrt(jnp.sum(vlad * vlad, axis=1, keepdims=True))
    vlad = vlad / jnp.maximum(norm, 1e-12)
    vlad = vlad.reshape(B, CLUSTER * NEWF)
    return vlad @ prm["Wfc"] + prm["bfc"]


# ---------------------------------- main -------------------------------------
if __name__ == "__main__":
    key = jax.random.PRNGKey(0)
    ks = jax.random.split(key, 10)

    prm = {
        "We": jax.random.normal(ks[0], (FEAT, EF), jnp.float32) * 0.05,
        "be": jax.random.normal(ks[1], (1, EF), jnp.float32) * 0.05,
        "Wa": jax.random.normal(ks[2], (EF, GROUPS), jnp.float32) * 0.05,
        "ba": jax.random.normal(ks[3], (1, GROUPS), jnp.float32) * 0.05,
        "Wc": jax.random.normal(ks[4], (EF, GC), jnp.float32) * 0.05,
        "cw": jax.random.normal(ks[5], (NEWF, CLUSTER), jnp.float32) * 0.01,
        "Wfc": jax.random.normal(ks[6], (NEWF * CLUSTER, OUT), jnp.float32) * 0.05,
        "bfc": jax.random.normal(ks[7], (1, OUT), jnp.float32) * 0.05,
    }

    x = jax.random.normal(ks[8], (BATCH, SEQ, FEAT), jnp.float32)
    lengths = jnp.array([[SEQ], [5]], dtype=jnp.int32)
    mask = (jnp.arange(SEQ)[None, :] < lengths).astype(jnp.float32)  # [B, N]

    kprm = prepare_params(prm)   # one-time weight concat, outside the jit

    out = jax.jit(nextvlad_pallas)(x, mask, kprm)
    out = jax.block_until_ready(out)

    ref = jax.jit(nextvlad_ref)(x, mask, prm)
    ref = jax.block_until_ready(ref)

    assert out.shape == (BATCH, OUT), out.shape
    assert jnp.allclose(out, ref, atol=1e-4, rtol=1e-4), (
        float(jnp.max(jnp.abs(out - ref))))

    print("KERNEL_OK")
</pallas_src>

<mosaic_0001>
module attributes {stable_mosaic.version = 11 : i64} {
  func.func @nextvlad_kernel(%arg0: i32, %arg1: memref<16x32xf32, #tpu.memory_space<vmem>>, %arg2: memref<16x1xf32, #tpu.memory_space<vmem>>, %arg3: memref<32x64xf32, #tpu.memory_space<vmem>>, %arg4: memref<1x64xf32, #tpu.memory_space<vmem>>, %arg5: memref<64x256xf32, #tpu.memory_space<vmem>>, %arg6: memref<1x256xf32, #tpu.memory_space<vmem>>, %arg7: memref<8x16xf32, #tpu.memory_space<vmem>>, %arg8: memref<128x64xf32, #tpu.memory_space<vmem>>, %arg9: memref<1x64xf32, #tpu.memory_space<vmem>>, %arg10: memref<2x64xf32, #tpu.memory_space<vmem>>, %arg11: memref<64x16xf32, #tpu.memory_space<vmem>>, %arg12: memref<64x8xf32, #tpu.memory_space<vmem>>, %arg13: memref<2x128xf32, #tpu.memory_space<vmem>>) attributes {dimension_semantics = [#tpu.dimension_semantics<arbitrary>], iteration_bounds = array<i64: 1>, scalar_prefetch = 0 : i64, scratch_operands = 3 : i64, tpu.core_type = #tpu.core_type<tc>, window_params = [{pipeline_mode = #tpu.pipeline_mode<synchronous>, transform_indices = @transform_0, window_bounds = array<i64: 16, 32>}, {pipeline_mode = #tpu.pipeline_mode<synchronous>, transform_indices = @transform_1, window_bounds = array<i64: 16, 1>}, {pipeline_mode = #tpu.pipeline_mode<synchronous>, transform_indices = @transform_2, window_bounds = array<i64: 32, 64>}, {pipeline_mode = #tpu.pipeline_mode<synchronous>, transform_indices = @transform_3, window_bounds = array<i64: 1, 64>}, {pipeline_mode = #tpu.pipeline_mode<synchronous>, transform_indices = @transform_4, window_bounds = array<i64: 64, 256>}, {pipeline_mode = #tpu.pipeline_mode<synchronous>, transform_indices = @transform_5, window_bounds = array<i64: 1, 256>}, {pipeline_mode = #tpu.pipeline_mode<synchronous>, transform_indices = @transform_6, window_bounds = array<i64: 8, 16>}, {pipeline_mode = #tpu.pipeline_mode<synchronous>, transform_indices = @transform_7, window_bounds = array<i64: 128, 64>}, {pipeline_mode = #tpu.pipeline_mode<synchronous>, transform_indices = @transform_8, window_bounds = array<i64: 1, 64>}, {pipeline_mode = #tpu.pipeline_mode<synchronous>, transform_indices = @transform_9, window_bounds = array<i64: 2, 64>}]} {
    %c0 = arith.constant 0 : index
    %c0_0 = arith.constant 0 : index
    %0 = vector.load %arg1[%c0, %c0_0] : memref<16x32xf32, #tpu.memory_space<vmem>>, vector<16x32xf32>
    %c0_1 = arith.constant 0 : index
    %c0_2 = arith.constant 0 : index
    %1 = vector.load %arg3[%c0_1, %c0_2] : memref<32x64xf32, #tpu.memory_space<vmem>>, vector<32x64xf32>
    %cst = arith.constant dense<0.000000e+00> : vector<16x64xf32>
    %2 = tpu.matmul %0, %1, %cst {dimension_numbers = #tpu.dot_dimension_numbers<[1], [0], [0], [1], [0, 0, 1, 1], [], []>} : vector<16x32xf32>, vector<32x64xf32>, vector<16x64xf32> -> vector<16x64xf32>
    %c0_3 = arith.constant 0 : index
    %c0_4 = arith.constant 0 : index
    %3 = vector.load %arg4[%c0_3, %c0_4] : memref<1x64xf32, #tpu.memory_space<vmem>>, vector<1x64xf32>
    %4 = vector.broadcast %3 : vector<1x64xf32> to vector<16x64xf32>
    %5 = arith.addf %2, %4 : vector<16x64xf32>
    %c0_5 = arith.constant 0 : index
    %c0_6 = arith.constant 0 : index
    %6 = vector.load %arg5[%c0_5, %c0_6] : memref<64x256xf32, #tpu.memory_space<vmem>>, vector<64x256xf32>
    %cst_7 = arith.constant dense<0.000000e+00> : vector<16x256xf32>
    %7 = tpu.matmul %5, %6, %cst_7 {dimension_numbers = #tpu.dot_dimension_numbers<[1], [0], [0], [1], [0, 0, 1, 1], [], []>} : vector<16x64xf32>, vector<64x256xf32>, vector<16x256xf32> -> vector<16x256xf32>
    %c0_8 = arith.constant 0 : index
    %c0_9 = arith.constant 0 : index
    %8 = vector.load %arg6[%c0_8, %c0_9] : memref<1x256xf32, #tpu.memory_space<vmem>>, vector<1x256xf32>
    %9 = vector.broadcast %8 : vector<1x256xf32> to vector<16x256xf32>
    %10 = arith.addf %7, %9 : vector<16x256xf32>
    %11 = vector.extract_strided_slice %10 {offsets = [0, 0], sizes = [16, 128], strides = [1, 1]} : vector<16x256xf32> to vector<16x128xf32>
    %12 = vector.extract_strided_slice %10 {offsets = [0, 128], sizes = [16, 8], strides = [1, 1]} : vector<16x256xf32> to vector<16x8xf32>
    %13 = arith.negf %12 : vector<16x8xf32>
    %14 = math.exp %13 : vector<16x8xf32>
    %cst_10 = arith.constant 1.000000e+00 : f32
    %15 = vector.broadcast %cst_10 : f32 to vector<16x8xf32>
    %16 = arith.addf %15, %14 : vector<16x8xf32>
    %17 = arith.divf %15, %16 : vector<16x8xf32>
    %c0_11 = arith.constant 0 : index
    %c0_12 = arith.constant 0 : index
    %18 = vector.load %arg2[%c0_11, %c0_12] : memref<16x1xf32, #tpu.memory_space<vmem>>, vector<16x1xf32>
    %19 = vector.broadcast %18 : vector<16x1xf32> to vector<16x8xf32>
    %20 = arith.mulf %17, %19 : vector<16x8xf32>
    %c0_13 = arith.constant 0 : index
    %c0_14 = arith.constant 0 : index
    %21 = vector.load %arg7[%c0_13, %c0_14] : memref<8x16xf32, #tpu.memory_space<vmem>>, vector<8x16xf32>
    %22 = vector.extract_strided_slice %5 {offsets = [0, 0], sizes = [8, 64], strides = [1, 1]} : vector<16x64xf32> to vector<8x64xf32>
    %23 = vector.extract_strided_slice %11 {offsets = [0, 0], sizes = [8, 128], strides = [1, 1]} : vector<16x128xf32> to vector<8x128xf32>
    %24 = vector.extract_strided_slice %20 {offsets = [0, 0], sizes = [8, 8], strides = [1, 1]} : vector<16x8xf32> to vector<8x8xf32>
    %25 = vector.extract_strided_slice %23 {offsets = [0, 0], sizes = [8, 16], strides = [1, 1]} : vector<8x128xf32> to vector<8x16xf32>
    %cst_15 = arith.constant dense<0xFF800000> : vector<8xf32>
    %26 = vector.multi_reduction <maximumf>, %25, %cst_15 [1] : vector<8x16xf32> to vector<8xf32>
    %27 = vector.shape_cast %26 : vector<8xf32> to vector<8x1xf32>
    %28 = vector.broadcast %27 : vector<8x1xf32> to vector<8x16xf32>
    %29 = arith.subf %25, %28 : vector<8x16xf32>
    %30 = math.exp %29 : vector<8x16xf32>
    %cst_16 = arith.constant dense<0.000000e+00> : vector<8xf32>
    %31 = vector.multi_reduction <add>, %30, %cst_16 [1] : vector<8x16xf32> to vector<8xf32>
    %32 = vector.shape_cast %31 : vector<8xf32> to vector<8x1xf32>
    %33 = vector.broadcast %32 : vector<8x1xf32> to vector<8x16xf32>
    %34 = arith.divf %30, %33 : vector<8x16xf32>
    %35 = vector.extract_strided_slice %24 {offsets = [0, 0], sizes = [8, 1], strides = [1, 1]} : vector<8x8xf32> to vector<8x1xf32>
    %36 = vector.broadcast %35 : vector<8x1xf32> to vector<8x16xf32>
    %37 = arith.mulf %34, %36 : vector<8x16xf32>
    %c0_17 = arith.constant 0 : index
    %c0_18 = arith.constant 0 : index
    %38 = vector.load %arg11[%c0_17, %c0_18] : memref<64x16xf32, #tpu.memory_space<vmem>>, vector<8x16xf32>
    tpu.vector_store %arg11[%c0_17, %c0_18], %37 {strides = array<i32>} : memref<64x16xf32, #tpu.memory_space<vmem>>, vector<8x16xf32>,
    %39 = vector.extract_strided_slice %22 {offsets = [0, 0], sizes = [8, 8], strides = [1, 1]} : vector<8x64xf32> to vector<8x8xf32>
    %c0_19 = arith.constant 0 : index
    %c0_20 = arith.constant 0 : index
    %40 = vector.load %arg12[%c0_19, %c0_20] : memref<64x8xf32, #tpu.memory_space<vmem>>, vector<8x8xf32>
    tpu.vector_store %arg12[%c0_19, %c0_20], %39 {strides = array<i32>} : memref<64x8xf32, #tpu.memory_space<vmem>>, vector<8x8xf32>,
    %41 = vector.extract_strided_slice %23 {offsets = [0, 16], sizes = [8, 16], strides = [1, 1]} : vector<8x128xf32> to vector<8x16xf32>
    %cst_21 = arith.constant dense<0xFF800000> : vector<8xf32>
    %42 = vector.multi_reduction <maximumf>, %41, %cst_21 [1] : vector<8x16xf32> to vector<8xf32>
    %43 = vector.shape_cast %42 : vector<8xf32> to vector<8x1xf32>
    %44 = vector.broadcast %43 : vector<8x1xf32> to vector<8x16xf32>
    %45 = arith.subf %41, %44 : vector<8x16xf32>
    %46 = math.exp %45 : vector<8x16xf32>
    %cst_22 = arith.constant dense<0.000000e+00> : vector<8xf32>
    %47 = vector.multi_reduction <add>, %46, %cst_22 [1] : vector<8x16xf32> to vector<8xf32>
    %48 = vector.shape_cast %47 : vector<8xf32> to vector<8x1xf32>
    %49 = vector.broadcast %48 : vector<8x1xf32> to vector<8x16xf32>
    %50 = arith.divf %46, %49 : vector<8x16xf32>
    %51 = vector.extract_strided_slice %24 {offsets = [0, 1], sizes = [8, 1], strides = [1, 1]} : vector<8x8xf32> to vector<8x1xf32>
    %52 = vector.broadcast %51 : vector<8x1xf32> to vector<8x16xf32>
    %53 = arith.mulf %50, %52 : vector<8x16xf32>
    %c8 = arith.constant 8 : index
    %c0_23 = arith.constant 0 : index
    %54 = vector.load %arg11[%c8, %c0_23] : memref<64x16xf32, #tpu.memory_space<vmem>>, vector<8x16xf32>
    tpu.vector_store %arg11[%c8, %c0_23], %53 {strides = array<i32>} : memref<64x16xf32, #tpu.memory_space<vmem>>, vector<8x16xf32>,
    %55 = vector.extract_strided_slice %22 {offsets = [0, 8], sizes = [8, 8], strides = [1, 1]} : vector<8x64xf32> to vector<8x8xf32>
    %c8_24 = arith.constant 8 : index
    %c0_25 = arith.constant 0 : index
    %56 = vector.load %arg12[%c8_24, %c0_25] : memref<64x8xf32, #tpu.memory_space<vmem>>, vector<8x8xf32>
    tpu.vector_store %arg12[%c8_24, %c0_25], %55 {strides = array<i32>} : memref<64x8xf32, #tpu.memory_space<vmem>>, vector<8x8xf32>,
    %57 = vector.extract_strided_slice %23 {offsets = [0, 32], sizes = [8, 16], strides = [1, 1]} : vector<8x128xf32> to vector<8x16xf32>
    %cst_26 = arith.constant dense<0xFF800000> : vector<8xf32>
    %58 = vector.multi_reduction <maximumf>, %57, %cst_26 [1] : vector<8x16xf32> to vector<8xf32>
    %59 = vector.shape_cast %58 : vector<8xf32> to vector<8x1xf32>
    %60 = vector.broadcast %59 : vector<8x1xf32> to vector<8x16xf32>
    %61 = arith.subf %57, %60 : vector<8x16xf32>
    %62 = math.exp %61 : vector<8x16xf32>
    %cst_27 = arith.constant dense<0.000000e+00> : vector<8xf32>
    %63 = vector.multi_reduction <add>, %62, %cst_27 [1] : vector<8x16xf32> to vector<8xf32>
    %64 = vector.shape_cast %63 : vector<8xf32> to vector<8x1xf32>
    %65 = vector.broadcast %64 : vector<8x1xf32> to vector<8x16xf32>
    %66 = arith.divf %62, %65 : vector<8x16xf32>
    %67 = vector.extract_strided_slice %24 {offsets = [0, 2], sizes = [8, 1], strides = [1, 1]} : vector<8x8xf32> to vector<8x1xf32>
    %68 = vector.broadcast %67 : vector<8x1xf32> to vector<8x16xf32>
    %69 = arith.mulf %66, %68 : vector<8x16xf32>
    %c16 = arith.constant 16 : index
    %c0_28 = arith.constant 0 : index
    %70 = vector.load %arg11[%c16, %c0_28] : memref<64x16xf32, #tpu.memory_space<vmem>>, vector<8x16xf32>
    tpu.vector_store %arg11[%c16, %c0_28], %69 {strides = array<i32>} : memref<64x16xf32, #tpu.memory_space<vmem>>, vector<8x16xf32>,
    %71 = vector.extract_strided_slice %22 {offsets = [0, 16], sizes = [8, 8], strides = [1, 1]} : vector<8x64xf32> to vector<8x8xf32>
    %c16_29 = arith.constant 16 : index
    %c0_30 = arith.constant 0 : index
    %72 = vector.load %arg12[%c16_29, %c0_30] : memref<64x8xf32, #tpu.memory_space<vmem>>, vector<8x8xf32>
    tpu.vector_store %arg12[%c16_29, %c0_30], %71 {strides = array<i32>} : memref<64x8xf32, #tpu.memory_space<vmem>>, vector<8x8xf32>,
    %73 = vector.extract_strided_slice %23 {offsets = [0, 48], sizes = [8, 16], strides = [1, 1]} : vector<8x128xf32> to vector<8x16xf32>
    %cst_31 = arith.constant dense<0xFF800000> : vector<8xf32>
    %74 = vector.multi_reduction <maximumf>, %73, %cst_31 [1] : vector<8x16xf32> to vector<8xf32>
    %75 = vector.shape_cast %74 : vector<8xf32> to vector<8x1xf32>
    %76 = vector.broadcast %75 : vector<8x1xf32> to vector<8x16xf32>
    %77 = arith.subf %73, %76 : vector<8x16xf32>
    %78 = math.exp %77 : vector<8x16xf32>
    %cst_32 = arith.constant dense<0.000000e+00> : vector<8xf32>
    %79 = vector.multi_reduction <add>, %78, %cst_32 [1] : vector<8x16xf32> to vector<8xf32>
    %80 = vector.shape_cast %79 : vector<8xf32> to vector<8x1xf32>
    %81 = vector.broadcast %80 : vector<8x1xf32> to vector<8x16xf32>
    %82 = arith.divf %78, %81 : vector<8x16xf32>
    %83 = vector.extract_strided_slice %24 {offsets = [0, 3], sizes = [8, 1], strides = [1, 1]} : vector<8x8xf32> to vector<8x1xf32>
    %84 = vector.broadcast %83 : vector<8x1xf32> to vector<8x16xf32>
    %85 = arith.mulf %82, %84 : vector<8x16xf32>
    %c24 = arith.constant 24 : index
    %c0_33 = arith.constant 0 : index
    %86 = vector.load %arg11[%c24, %c0_33] : memref<64x16xf32, #tpu.memory_space<vmem>>, vector<8x16xf32>
    tpu.vector_store %arg11[%c24, %c0_33], %85 {strides = array<i32>} : memref<64x16xf32, #tpu.memory_space<vmem>>, vector<8x16xf32>,
    %87 = vector.extract_strided_slice %22 {offsets = [0, 24], sizes = [8, 8], strides = [1, 1]} : vector<8x64xf32> to vector<8x8xf32>
    %c24_34 = arith.constant 24 : index
    %c0_35 = arith.constant 0 : index
    %88 = vector.load %arg12[%c24_34, %c0_35] : memref<64x8xf32, #tpu.memory_space<vmem>>, vector<8x8xf32>
    tpu.vector_store %arg12[%c24_34, %c0_35], %87 {strides = array<i32>} : memref<64x8xf32, #tpu.memory_space<vmem>>, vector<8x8xf32>,
    %89 = vector.extract_strided_slice %23 {offsets = [0, 64], sizes = [8, 16], strides = [1, 1]} : vector<8x128xf32> to vector<8x16xf32>
    %cst_36 = arith.constant dense<0xFF800000> : vector<8xf32>
    %90 = vector.multi_reduction <maximumf>, %89, %cst_36 [1] : vector<8x16xf32> to vector<8xf32>
    %91 = vector.shape_cast %90 : vector<8xf32> to vector<8x1xf32>
    %92 = vector.broadcast %91 : vector<8x1xf32> to vector<8x16xf32>
    %93 = arith.subf %89, %92 : vector<8x16xf32>
    %94 = math.exp %93 : vector<8x16xf32>
    %cst_37 = arith.constant dense<0.000000e+00> : vector<8xf32>
    %95 = vector.multi_reduction <add>, %94, %cst_37 [1] : vector<8x16xf32> to vector<8xf32>
    %96 = vector.shape_cast %95 : vector<8xf32> to vector<8x1xf32>
    %97 = vector.broadcast %96 : vector<8x1xf32> to vector<8x16xf32>
    %98 = arith.divf %94, %97 : vector<8x16xf32>
    %99 = vector.extract_strided_slice %24 {offsets = [0, 4], sizes = [8, 1], strides = [1, 1]} : vector<8x8xf32> to vector<8x1xf32>
    %100 = vector.broadcast %99 : vector<8x1xf32> to vector<8x16xf32>
    %101 = arith.mulf %98, %100 : vector<8x16xf32>
    %c32 = arith.constant 32 : index
    %c0_38 = arith.constant 0 : index
    %102 = vector.load %arg11[%c32, %c0_38] : memref<64x16xf32, #tpu.memory_space<vmem>>, vector<8x16xf32>
    tpu.vector_store %arg11[%c32, %c0_38], %101 {strides = array<i32>} : memref<64x16xf32, #tpu.memory_space<vmem>>, vector<8x16xf32>,
    %103 = vector.extract_strided_slice %22 {offsets = [0, 32], sizes = [8, 8], strides = [1, 1]} : vector<8x64xf32> to vector<8x8xf32>
    %c32_39 = arith.constant 32 : index
    %c0_40 = arith.constant 0 : index
    %104 = vector.load %arg12[%c32_39, %c0_40] : memref<64x8xf32, #tpu.memory_space<vmem>>, vector<8x8xf32>
    tpu.vector_store %arg12[%c32_39, %c0_40], %103 {strides = array<i32>} : memref<64x8xf32, #tpu.memory_space<vmem>>, vector<8x8xf32>,
    %105 = vector.extract_strided_slice %23 {offsets = [0, 80], sizes = [8, 16], strides = [1, 1]} : vector<8x128xf32> to vector<8x16xf32>
    %cst_41 = arith.constant dense<0xFF800000> : vector<8xf32>
    %106 = vector.multi_reduction <maximumf>, %105, %cst_41 [1] : vector<8x16xf32> to vector<8xf32>
    %107 = vector.shape_cast %106 : vector<8xf32> to vector<8x1xf32>
    %108 = vector.broadcast %107 : vector<8x1xf32> to vector<8x16xf32>
    %109 = arith.subf %105, %108 : vector<8x16xf32>
    %110 = math.exp %109 : vector<8x16xf32>
    %cst_42 = arith.constant dense<0.000000e+00> : vector<8xf32>
    %111 = vector.multi_reduction <add>, %110, %cst_42 [1] : vector<8x16xf32> to vector<8xf32>
    %112 = vector.shape_cast %111 : vector<8xf32> to vector<8x1xf32>
    %113 = vector.broadcast %112 : vector<8x1xf32> to vector<8x16xf32>
    %114 = arith.divf %110, %113 : vector<8x16xf32>
    %115 = vector.extract_strided_slice %24 {offsets = [0, 5], sizes = [8, 1], strides = [1, 1]} : vector<8x8xf32> to vector<8x1xf32>
    %116 = vector.broadcast %115 : vector<8x1xf32> to vector<8x16xf32>
    %117 = arith.mulf %114, %116 : vector<8x16xf32>
    %c40 = arith.constant 40 : index
    %c0_43 = arith.constant 0 : index
    %118 = vector.load %arg11[%c40, %c0_43] : memref<64x16xf32, #tpu.memory_space<vmem>>, vector<8x16xf32>
    tpu.vector_store %arg11[%c40, %c0_43], %117 {strides = array<i32>} : memref<64x16xf32, #tpu.memory_space<vmem>>, vector<8x16xf32>,
    %119 = vector.extract_strided_slice %22 {offsets = [0, 40], sizes = [8, 8], strides = [1, 1]} : vector<8x64xf32> to vector<8x8xf32>
    %c40_44 = arith.constant 40 : index
    %c0_45 = arith.constant 0 : index
    %120 = vector.load %arg12[%c40_44, %c0_45] : memref<64x8xf32, #tpu.memory_space<vmem>>, vector<8x8xf32>
    tpu.vector_store %arg12[%c40_44, %c0_45], %119 {strides = array<i32>} : memref<64x8xf32, #tpu.memory_space<vmem>>, vector<8x8xf32>,
    %121 = vector.extract_strided_slice %23 {offsets = [0, 96], sizes = [8, 16], strides = [1, 1]} : vector<8x128xf32> to vector<8x16xf32>
    %cst_46 = arith.constant dense<0xFF800000> : vector<8xf32>
    %122 = vector.multi_reduction <maximumf>, %121, %cst_46 [1] : vector<8x16xf32> to vector<8xf32>
    %123 = vector.shape_cast %122 : vector<8xf32> to vector<8x1xf32>
    %124 = vector.broadcast %123 : vector<8x1xf32> to vector<8x16xf32>
    %125 = arith.subf %121, %124 : vector<8x16xf32>
    %126 = math.exp %125 : vector<8x16xf32>
    %cst_47 = arith.constant dense<0.000000e+00> : vector<8xf32>
    %127 = vector.multi_reduction <add>, %126, %cst_47 [1] : vector<8x16xf32> to vector<8xf32>
    %128 = vector.shape_cast %127 : vector<8xf32> to vector<8x1xf32>
    %129 = vector.broadcast %128 : vector<8x1xf32> to vector<8x16xf32>
    %130 = arith.divf %126, %129 : vector<8x16xf32>
    %131 = vector.extract_strided_slice %24 {offsets = [0, 6], sizes = [8, 1], strides = [1, 1]} : vector<8x8xf32> to vector<8x1xf32>
    %132 = vector.broadcast %131 : vector<8x1xf32> to vector<8x16xf32>
    %133 = arith.mulf %130, %132 : vector<8x16xf32>
    %c48 = arith.constant 48 : index
    %c0_48 = arith.constant 0 : index
    %134 = vector.load %arg11[%c48, %c0_48] : memref<64x16xf32, #tpu.memory_space<vmem>>, vector<8x16xf32>
    tpu.vector_store %arg11[%c48, %c0_48], %133 {strides = array<i32>} : memref<64x16xf32, #tpu.memory_space<vmem>>, vector<8x16xf32>,
    %135 = vector.extract_strided_slice %22 {offsets = [0, 48], sizes = [8, 8], strides = [1, 1]} : vector<8x64xf32> to vector<8x8xf32>
    %c48_49 = arith.constant 48 : index
    %c0_50 = arith.constant 0 : index
    %136 = vector.load %arg12[%c48_49, %c0_50] : memref<64x8xf32, #tpu.memory_space<vmem>>, vector<8x8xf32>
    tpu.vector_store %arg12[%c48_49, %c0_50], %135 {strides = array<i32>} : memref<64x8xf32, #tpu.memory_space<vmem>>, vector<8x8xf32>,
    %137 = vector.extract_strided_slice %23 {offsets = [0, 112], sizes = [8, 16], strides = [1, 1]} : vector<8x128xf32> to vector<8x16xf32>
    %cst_51 = arith.constant dense<0xFF800000> : vector<8xf32>
    %138 = vector.multi_reduction <maximumf>, %137, %cst_51 [1] : vector<8x16xf32> to vector<8xf32>
    %139 = vector.shape_cast %138 : vector<8xf32> to vector<8x1xf32>
    %140 = vector.broadcast %139 : vector<8x1xf32> to vector<8x16xf32>
    %141 = arith.subf %137, %140 : vector<8x16xf32>
    %142 = math.exp %141 : vector<8x16xf32>
    %cst_52 = arith.constant dense<0.000000e+00> : vector<8xf32>
    %143 = vector.multi_reduction <add>, %142, %cst_52 [1] : vector<8x16xf32> to vector<8xf32>
    %144 = vector.shape_cast %143 : vector<8xf32> to vector<8x1xf32>
    %145 = vector.broadcast %144 : vector<8x1xf32> to vector<8x16xf32>
    %146 = arith.divf %142, %145 : vector<8x16xf32>
    %147 = vector.extract_strided_slice %24 {offsets = [0, 7], sizes = [8, 1], strides = [1, 1]} : vector<8x8xf32> to vector<8x1xf32>
    %148 = vector.broadcast %147 : vector<8x1xf32> to vector<8x16xf32>
    %149 = arith.mulf %146, %148 : vector<8x16xf32>
    %c56 = arith.constant 56 : index
    %c0_53 = arith.constant 0 : index
    %150 = vector.load %arg11[%c56, %c0_53] : memref<64x16xf32, #tpu.memory_space<vmem>>, vector<8x16xf32>
    tpu.vector_store %arg11[%c56, %c0_53], %149 {strides = array<i32>} : memref<64x16xf32, #tpu.memory_space<vmem>>, vector<8x16xf32>,
    %151 = vector.extract_strided_slice %22 {offsets = [0, 56], sizes = [8, 8], strides = [1, 1]} : vector<8x64xf32> to vector<8x8xf32>
    %c56_54 = arith.constant 56 : index
    %c0_55 = arith.constant 0 : index
    %152 = vector.load %arg12[%c56_54, %c0_55] : memref<64x8xf32, #tpu.memory_space<vmem>>, vector<8x8xf32>
    tpu.vector_store %arg12[%c56_54, %c0_55], %151 {strides = array<i32>} : memref<64x8xf32, #tpu.memory_space<vmem>>, vector<8x8xf32>,
    %c0_56 = arith.constant 0 : index
    %c0_57 = arith.constant 0 : index
    %153 = vector.load %arg11[%c0_56, %c0_57] : memref<64x16xf32, #tpu.memory_space<vmem>>, vector<64x16xf32>
    %c0_58 = arith.constant 0 : index
    %c0_59 = arith.constant 0 : index
    %154 = vector.load %arg12[%c0_58, %c0_59] : memref<64x8xf32, #tpu.memory_space<vmem>>, vector<64x8xf32>
    %cst_60 = arith.constant dense<0.000000e+00> : vector<16xf32>
    %155 = vector.multi_reduction <add>, %153, %cst_60 [0] : vector<64x16xf32> to vector<16xf32>
    %156 = vector.shape_cast %155 : vector<16xf32> to vector<1x16xf32>
    %cst_61 = arith.constant dense<0.000000e+00> : vector<8x16xf32>
    %157 = tpu.matmul %154, %153, %cst_61 {dimension_numbers = #tpu.dot_dimension_numbers<[0], [0], [1], [1], [0, 1, 1, 1], [], []>} : vector<64x8xf32>, vector<64x16xf32>, vector<8x16xf32> -> vector<8x16xf32>
    %158 = vector.broadcast %156 : vector<1x16xf32> to vector<8x16xf32>
    %159 = arith.mulf %158, %21 : vector<8x16xf32>
    %160 = arith.subf %157, %159 : vector<8x16xf32>
    %161 = arith.mulf %160, %160 : vector<8x16xf32>
    %cst_62 = arith.constant dense<0.000000e+00> : vector<16xf32>
    %162 = vector.multi_reduction <add>, %161, %cst_62 [0] : vector<8x16xf32> to vector<16xf32>
    %163 = vector.shape_cast %162 : vector<16xf32> to vector<1x16xf32>
    %cst_63 = arith.constant 1.000000e-24 : f32
    %164 = vector.broadcast %cst_63 : f32 to vector<1x16xf32>
    %165 = arith.maximumf %163, %164 : vector<1x16xf32>
    %166 = math.rsqrt %165 : vector<1x16xf32>
    %167 = vector.broadcast %166 : vector<1x16xf32> to vector<8x16xf32>
    %168 = arith.mulf %160, %167 : vector<8x16xf32>
    %169 = vector.extract_strided_slice %168 {offsets = [0, 0], sizes = [1, 16], strides = [1, 1]} : vector<8x16xf32> to vector<1x16xf32>
    %c0_64 = arith.constant 0 : index
    %c0_65 = arith.constant 0 : index
    %170 = vector.load %arg13[%c0_64, %c0_65] : memref<2x128xf32, #tpu.memory_space<vmem>>, vector<1x16xf32>
    tpu.vector_store %arg13[%c0_64, %c0_65], %169 {strides = array<i32>} : memref<2x128xf32, #tpu.memory_space<vmem>>, vector<1x16xf32>,
    %171 = vector.extract_strided_slice %168 {offsets = [1, 0], sizes = [1, 16], strides = [1, 1]} : vector<8x16xf32> to vector<1x16xf32>
    %c0_66 = arith.constant 0 : index
    %c16_67 = arith.constant 16 : index
    %172 = vector.load %arg13[%c0_66, %c16_67] : memref<2x128xf32, #tpu.memory_space<vmem>>, vector<1x16xf32>
    tpu.vector_store %arg13[%c0_66, %c16_67], %171 {strides = array<i32>} : memref<2x128xf32, #tpu.memory_space<vmem>>, vector<1x16xf32>,
    %173 = vector.extract_strided_slice %168 {offsets = [2, 0], sizes = [1, 16], strides = [1, 1]} : vector<8x16xf32> to vector<1x16xf32>
    %c0_68 = arith.constant 0 : index
    %c32_69 = arith.constant 32 : index
    %174 = vector.load %arg13[%c0_68, %c32_69] : memref<2x128xf32, #tpu.memory_space<vmem>>, vector<1x16xf32>
    tpu.vector_store %arg13[%c0_68, %c32_69], %173 {strides = array<i32>} : memref<2x128xf32, #tpu.memory_space<vmem>>, vector<1x16xf32>,
    %175 = vector.extract_strided_slice %168 {offsets = [3, 0], sizes = [1, 16], strides = [1, 1]} : vector<8x16xf32> to vector<1x16xf32>
    %c0_70 = arith.constant 0 : index
    %c48_71 = arith.constant 48 : index
    %176 = vector.load %arg13[%c0_70, %c48_71] : memref<2x128xf32, #tpu.memory_space<vmem>>, vector<1x16xf32>
    tpu.vector_store %arg13[%c0_70, %c48_71], %175 {strides = array<i32>} : memref<2x128xf32, #tpu.memory_space<vmem>>, vector<1x16xf32>,
    %177 = vector.extract_strided_slice %168 {offsets = [4, 0], sizes = [1, 16], strides = [1, 1]} : vector<8x16xf32> to vector<1x16xf32>
    %c0_72 = arith.constant 0 : index
    %c64 = arith.constant 64 : index
    %178 = vector.load %arg13[%c0_72, %c64] : memref<2x128xf32, #tpu.memory_space<vmem>>, vector<1x16xf32>
    tpu.vector_store %arg13[%c0_72, %c64], %177 {strides = array<i32>} : memref<2x128xf32, #tpu.memory_space<vmem>>, vector<1x16xf32>,
    %179 = vector.extract_strided_slice %168 {offsets = [5, 0], sizes = [1, 16], strides = [1, 1]} : vector<8x16xf32> to vector<1x16xf32>
    %c0_73 = arith.constant 0 : index
    %c80 = arith.constant 80 : index
    %180 = vector.load %arg13[%c0_73, %c80] : memref<2x128xf32, #tpu.memory_space<vmem>>, vector<1x16xf32>
    tpu.vector_store %arg13[%c0_73, %c80], %179 {strides = array<i32>} : memref<2x128xf32, #tpu.memory_space<vmem>>, vector<1x16xf32>,
    %181 = vector.extract_strided_slice %168 {offsets = [6, 0], sizes = [1, 16], strides = [1, 1]} : vector<8x16xf32> to vector<1x16xf32>
    %c0_74 = arith.constant 0 : index
    %c96 = arith.constant 96 : index
    %182 = vector.load %arg13[%c0_74, %c96] : memref<2x128xf32, #tpu.memory_space<vmem>>, vector<1x16xf32>
    tpu.vector_store %arg13[%c0_74, %c96], %181 {strides = array<i32>} : memref<2x128xf32, #tpu.memory_space<vmem>>, vector<1x16xf32>,
    %183 = vector.extract_strided_slice %168 {offsets = [7, 0], sizes = [1, 16], strides = [1, 1]} : vector<8x16xf32> to vector<1x16xf32>
    %c0_75 = arith.constant 0 : index
    %c112 = arith.constant 112 : index
    %184 = vector.load %arg13[%c0_75, %c112] : memref<2x128xf32, #tpu.memory_space<vmem>>, vector<1x16xf32>
    tpu.vector_store %arg13[%c0_75, %c112], %183 {strides = array<i32>} : memref<2x128xf32, #tpu.memory_space<vmem>>, vector<1x16xf32>,
    %185 = vector.extract_strided_slice %5 {offsets = [8, 0], sizes = [8, 64], strides = [1, 1]} : vector<16x64xf32> to vector<8x64xf32>
    %186 = vector.extract_strided_slice %11 {offsets = [8, 0], sizes = [8, 128], strides = [1, 1]} : vector<16x128xf32> to vector<8x128xf32>
    %187 = vector.extract_strided_slice %20 {offsets = [8, 0], sizes = [8, 8], strides = [1, 1]} : vector<16x8xf32> to vector<8x8xf32>
    %188 = vector.extract_strided_slice %186 {offsets = [0, 0], sizes = [8, 16], strides = [1, 1]} : vector<8x128xf32> to vector<8x16xf32>
    %cst_76 = arith.constant dense<0xFF800000> : vector<8xf32>
    %189 = vector.multi_reduction <maximumf>, %188, %cst_76 [1] : vector<8x16xf32> to vector<8xf32>
    %190 = vector.shape_cast %189 : vector<8xf32> to vector<8x1xf32>
    %191 = vector.broadcast %190 : vector<8x1xf32> to vector<8x16xf32>
    %192 = arith.subf %188, %191 : vector<8x16xf32>
    %193 = math.exp %192 : vector<8x16xf32>
    %cst_77 = arith.constant dense<0.000000e+00> : vector<8xf32>
    %194 = vector.multi_reduction <add>, %193, %cst_77 [1] : vector<8x16xf32> to vector<8xf32>
    %195 = vector.shape_cast %194 : vector<8xf32> to vector<8x1xf32>
    %196 = vector.broadcast %195 : vector<8x1xf32> to vector<8x16xf32>
    %197 = arith.divf %193, %196 : vector<8x16xf32>
    %198 = vector.extract_strided_slice %187 {offsets = [0, 0], sizes = [8, 1], strides = [1, 1]} : vector<8x8xf32> to vector<8x1xf32>
    %199 = vector.broadcast %198 : vector<8x1xf32> to vector<8x16xf32>
    %200 = arith.mulf %197, %199 : vector<8x16xf32>
    %c0_78 = arith.constant 0 : index
    %c0_79 = arith.constant 0 : index
    %201 = vector.load %arg11[%c0_78, %c0_79] : memref<64x16xf32, #tpu.memory_space<vmem>>, vector<8x16xf32>
    tpu.vector_store %arg11[%c0_78, %c0_79], %200 {strides = array<i32>} : memref<64x16xf32, #tpu.memory_space<vmem>>, vector<8x16xf32>,
    %202 = vector.extract_strided_slice %185 {offsets = [0, 0], sizes = [8, 8], strides = [1, 1]} : vector<8x64xf32> to vector<8x8xf32>
    %c0_80 = arith.constant 0 : index
    %c0_81 = arith.constant 0 : index
    %203 = vector.load %arg12[%c0_80, %c0_81] : memref<64x8xf32, #tpu.memory_space<vmem>>, vector<8x8xf32>
    tpu.vector_store %arg12[%c0_80, %c0_81], %202 {strides = array<i32>} : memref<64x8xf32, #tpu.memory_space<vmem>>, vector<8x8xf32>,
    %204 = vector.extract_strided_slice %186 {offsets = [0, 16], sizes = [8, 16], strides = [1, 1]} : vector<8x128xf32> to vector<8x16xf32>
    %cst_82 = arith.constant dense<0xFF800000> : vector<8xf32>
    %205 = vector.multi_reduction <maximumf>, %204, %cst_82 [1] : vector<8x16xf32> to vector<8xf32>
    %206 = vector.shape_cast %205 : vector<8xf32> to vector<8x1xf32>
    %207 = vector.broadcast %206 : vector<8x1xf32> to vector<8x16xf32>
    %208 = arith.subf %204, %207 : vector<8x16xf32>
    %209 = math.exp %208 : vector<8x16xf32>
    %cst_83 = arith.constant dense<0.000000e+00> : vector<8xf32>
    %210 = vector.multi_reduction <add>, %209, %cst_83 [1] : vector<8x16xf32> to vector<8xf32>
    %211 = vector.shape_cast %210 : vector<8xf32> to vector<8x1xf32>
    %212 = vector.broadcast %211 : vector<8x1xf32> to vector<8x16xf32>
    %213 = arith.divf %209, %212 : vector<8x16xf32>
    %214 = vector.extract_strided_slice %187 {offsets = [0, 1], sizes = [8, 1], strides = [1, 1]} : vector<8x8xf32> to vector<8x1xf32>
    %215 = vector.broadcast %214 : vector<8x1xf32> to vector<8x16xf32>
    %216 = arith.mulf %213, %215 : vector<8x16xf32>
    %c8_84 = arith.constant 8 : index
    %c0_85 = arith.constant 0 : index
    %217 = vector.load %arg11[%c8_84, %c0_85] : memref<64x16xf32, #tpu.memory_space<vmem>>, vector<8x16xf32>
    tpu.vector_store %arg11[%c8_84, %c0_85], %216 {strides = array<i32>} : memref<64x16xf32, #tpu.memory_space<vmem>>, vector<8x16xf32>,
    %218 = vector.extract_strided_slice %185 {offsets = [0, 8], sizes = [8, 8], strides = [1, 1]} : vector<8x64xf32> to vector<8x8xf32>
    %c8_86 = arith.constant 8 : index
    %c0_87 = arith.constant 0 : index
    %219 = vector.load %arg12[%c8_86, %c0_87] : memref<64x8xf32, #tpu.memory_space<vmem>>, vector<8x8xf32>
    tpu.vector_store %arg12[%c8_86, %c0_87], %218 {strides = array<i32>} : memref<64x8xf32, #tpu.memory_space<vmem>>, vector<8x8xf32>,
    %220 = vector.extract_strided_slice %186 {offsets = [0, 32], sizes = [8, 16], strides = [1, 1]} : vector<8x128xf32> to vector<8x16xf32>
    %cst_88 = arith.constant dense<0xFF800000> : vector<8xf32>
    %221 = vector.multi_reduction <maximumf>, %220, %cst_88 [1] : vector<8x16xf32> to vector<8xf32>
    %222 = vector.shape_cast %221 : vector<8xf32> to vector<8x1xf32>
    %223 = vector.broadcast %222 : vector<8x1xf32> to vector<8x16xf32>
    %224 = arith.subf %220, %223 : vector<8x16xf32>
    %225 = math.exp %224 : vector<8x16xf32>
    %cst_89 = arith.constant dense<0.000000e+00> : vector<8xf32>
    %226 = vector.multi_reduction <add>, %225, %cst_89 [1] : vector<8x16xf32> to vector<8xf32>
    %227 = vector.shape_cast %226 : vector<8xf32> to vector<8x1xf32>
    %228 = vector.broadcast %227 : vector<8x1xf32> to vector<8x16xf32>
    %229 = arith.divf %225, %228 : vector<8x16xf32>
    %230 = vector.extract_strided_slice %187 {offsets = [0, 2], sizes = [8, 1], strides = [1, 1]} : vector<8x8xf32> to vector<8x1xf32>
    %231 = vector.broadcast %230 : vector<8x1xf32> to vector<8x16xf32>
    %232 = arith.mulf %229, %231 : vector<8x16xf32>
    %c16_90 = arith.constant 16 : index
    %c0_91 = arith.constant 0 : index
    %233 = vector.load %arg11[%c16_90, %c0_91] : memref<64x16xf32, #tpu.memory_space<vmem>>, vector<8x16xf32>
    tpu.vector_store %arg11[%c16_90, %c0_91], %232 {strides = array<i32>} : memref<64x16xf32, #tpu.memory_space<vmem>>, vector<8x16xf32>,
    %234 = vector.extract_strided_slice %185 {offsets = [0, 16], sizes = [8, 8], strides = [1, 1]} : vector<8x64xf32> to vector<8x8xf32>
    %c16_92 = arith.constant 16 : index
    %c0_93 = arith.constant 0 : index
    %235 = vector.load %arg12[%c16_92, %c0_93] : memref<64x8xf32, #tpu.memory_space<vmem>>, vector<8x8xf32>
    tpu.vector_store %arg12[%c16_92, %c0_93], %234 {strides = array<i32>} : memref<64x8xf32, #tpu.memory_space<vmem>>, vector<8x8xf32>,
    %236 = vector.extract_strided_slice %186 {offsets = [0, 48], sizes = [8, 16], strides = [1, 1]} : vector<8x128xf32> to vector<8x16xf32>
    %cst_94 = arith.constant dense<0xFF800000> : vector<8xf32>
    %237 = vector.multi_reduction <maximumf>, %236, %cst_94 [1] : vector<8x16xf32> to vector<8xf32>
    %238 = vector.shape_cast %237 : vector<8xf32> to vector<8x1xf32>
    %239 = vector.broadcast %238 : vector<8x1xf32> to vector<8x16xf32>
    %240 = arith.subf %236, %239 : vector<8x16xf32>
    %241 = math.exp %240 : vector<8x16xf32>
    %cst_95 = arith.constant dense<0.000000e+00> : vector<8xf32>
    %242 = vector.multi_reduction <add>, %241, %cst_95 [1] : vector<8x16xf32> to vector<8xf32>
    %243 = vector.shape_cast %242 : vector<8xf32> to vector<8x1xf32>
    %244 = vector.broadcast %243 : vector<8x1xf32> to vector<8x16xf32>
    %245 = arith.divf %241, %244 : vector<8x16xf32>
    %246 = vector.extract_strided_slice %187 {offsets = [0, 3], sizes = [8, 1], strides = [1, 1]} : vector<8x8xf32> to vector<8x1xf32>
    %247 = vector.broadcast %246 : vector<8x1xf32> to vector<8x16xf32>
    %248 = arith.mulf %245, %247 : vector<8x16xf32>
    %c24_96 = arith.constant 24 : index
    %c0_97 = arith.constant 0 : index
    %249 = vector.load %arg11[%c24_96, %c0_97] : memref<64x16xf32, #tpu.memory_space<vmem>>, vector<8x16xf32>
    tpu.vector_store %arg11[%c24_96, %c0_97], %248 {strides = array<i32>} : memref<64x16xf32, #tpu.memory_space<vmem>>, vector<8x16xf32>,
    %250 = vector.extract_strided_slice %185 {offsets = [0, 24], sizes = [8, 8], strides = [1, 1]} : vector<8x64xf32> to vector<8x8xf32>
    %c24_98 = arith.constant 24 : index
    %c0_99 = arith.constant 0 : index
    %251 = vector.load %arg12[%c24_98, %c0_99] : memref<64x8xf32, #tpu.memory_space<vmem>>, vector<8x8xf32>
    tpu.vector_store %arg12[%c24_98, %c0_99], %250 {strides = array<i32>} : memref<64x8xf32, #tpu.memory_space<vmem>>, vector<8x8xf32>,
    %252 = vector.extract_strided_slice %186 {offsets = [0, 64], sizes = [8, 16], strides = [1, 1]} : vector<8x128xf32> to vector<8x16xf32>
    %cst_100 = arith.constant dense<0xFF800000> : vector<8xf32>
    %253 = vector.multi_reduction <maximumf>, %252, %cst_100 [1] : vector<8x16xf32> to vector<8xf32>
    %254 = vector.shape_cast %253 : vector<8xf32> to vector<8x1xf32>
    %255 = vector.broadcast %254 : vector<8x1xf32> to vector<8x16xf32>
    %256 = arith.subf %252, %255 : vector<8x16xf32>
    %257 = math.exp %256 : vector<8x16xf32>
    %cst_101 = arith.constant dense<0.000000e+00> : vector<8xf32>
    %258 = vector.multi_reduction <add>, %257, %cst_101 [1] : vector<8x16xf32> to vector<8xf32>
    %259 = vector.shape_cast %258 : vector<8xf32> to vector<8x1xf32>
    %260 = vector.broadcast %259 : vector<8x1xf32> to vector<8x16xf32>
    %261 = arith.divf %257, %260 : vector<8x16xf32>
    %262 = vector.extract_strided_slice %187 {offsets = [0, 4], sizes = [8, 1], strides = [1, 1]} : vector<8x8xf32> to vector<8x1xf32>
    %263 = vector.broadcast %262 : vector<8x1xf32> to vector<8x16xf32>
    %264 = arith.mulf %261, %263 : vector<8x16xf32>
    %c32_102 = arith.constant 32 : index
    %c0_103 = arith.constant 0 : index
    %265 = vector.load %arg11[%c32_102, %c0_103] : memref<64x16xf32, #tpu.memory_space<vmem>>, vector<8x16xf32>
    tpu.vector_store %arg11[%c32_102, %c0_103], %264 {strides = array<i32>} : memref<64x16xf32, #tpu.memory_space<vmem>>, vector<8x16xf32>,
    %266 = vector.extract_strided_slice %185 {offsets = [0, 32], sizes = [8, 8], strides = [1, 1]} : vector<8x64xf32> to vector<8x8xf32>
    %c32_104 = arith.constant 32 : index
    %c0_105 = arith.constant 0 : index
    %267 = vector.load %arg12[%c32_104, %c0_105] : memref<64x8xf32, #tpu.memory_space<vmem>>, vector<8x8xf32>
    tpu.vector_store %arg12[%c32_104, %c0_105], %266 {strides = array<i32>} : memref<64x8xf32, #tpu.memory_space<vmem>>, vector<8x8xf32>,
    %268 = vector.extract_strided_slice %186 {offsets = [0, 80], sizes = [8, 16], strides = [1, 1]} : vector<8x128xf32> to vector<8x16xf32>
    %cst_106 = arith.constant dense<0xFF800000> : vector<8xf32>
    %269 = vector.multi_reduction <maximumf>, %268, %cst_106 [1] : vector<8x16xf32> to vector<8xf32>
    %270 = vector.shape_cast %269 : vector<8xf32> to vector<8x1xf32>
    %271 = vector.broadcast %270 : vector<8x1xf32> to vector<8x16xf32>
    %272 = arith.subf %268, %271 : vector<8x16xf32>
    %273 = math.exp %272 : vector<8x16xf32>
    %cst_107 = arith.constant dense<0.000000e+00> : vector<8xf32>
    %274 = vector.multi_reduction <add>, %273, %cst_107 [1] : vector<8x16xf32> to vector<8xf32>
    %275 = vector.shape_cast %274 : vector<8xf32> to vector<8x1xf32>
    %276 = vector.broadcast %275 : vector<8x1xf32> to vector<8x16xf32>
    %277 = arith.divf %273, %276 : vector<8x16xf32>
    %278 = vector.extract_strided_slice %187 {offsets = [0, 5], sizes = [8, 1], strides = [1, 1]} : vector<8x8xf32> to vector<8x1xf32>
    %279 = vector.broadcast %278 : vector<8x1xf32> to vector<8x16xf32>
    %280 = arith.mulf %277, %279 : vector<8x16xf32>
    %c40_108 = arith.constant 40 : index
    %c0_109 = arith.constant 0 : index
    %281 = vector.load %arg11[%c40_108, %c0_109] : memref<64x16xf32, #tpu.memory_space<vmem>>, vector<8x16xf32>
    tpu.vector_store %arg11[%c40_108, %c0_109], %280 {strides = array<i32>} : memref<64x16xf32, #tpu.memory_space<vmem>>, vector<8x16xf32>,
    %282 = vector.extract_strided_slice %185 {offsets = [0, 40], sizes = [8, 8], strides = [1, 1]} : vector<8x64xf32> to vector<8x8xf32>
    %c40_110 = arith.constant 40 : index
    %c0_111 = arith.constant 0 : index
    %283 = vector.load %arg12[%c40_110, %c0_111] : memref<64x8xf32, #tpu.memory_space<vmem>>, vector<8x8xf32>
    tpu.vector_store %arg12[%c40_110, %c0_111], %282 {strides = array<i32>} : memref<64x8xf32, #tpu.memory_space<vmem>>, vector<8x8xf32>,
    %284 = vector.extract_strided_slice %186 {offsets = [0, 96], sizes = [8, 16], strides = [1, 1]} : vector<8x128xf32> to vector<8x16xf32>
    %cst_112 = arith.constant dense<0xFF800000> : vector<8xf32>
    %285 = vector.multi_reduction <maximumf>, %284, %cst_112 [1] : vector<8x16xf32> to vector<8xf32>
    %286 = vector.shape_cast %285 : vector<8xf32> to vector<8x1xf32>
    %287 = vector.broadcast %286 : vector<8x1xf32> to vector<8x16xf32>
    %288 = arith.subf %284, %287 : vector<8x16xf32>
    %289 = math.exp %288 : vector<8x16xf32>
    %cst_113 = arith.constant dense<0.000000e+00> : vector<8xf32>
    %290 = vector.multi_reduction <add>, %289, %cst_113 [1] : vector<8x16xf32> to vector<8xf32>
    %291 = vector.shape_cast %290 : vector<8xf32> to vector<8x1xf32>
    %292 = vector.broadcast %291 : vector<8x1xf32> to vector<8x16xf32>
    %293 = arith.divf %289, %292 : vector<8x16xf32>
    %294 = vector.extract_strided_slice %187 {offsets = [0, 6], sizes = [8, 1], strides = [1, 1]} : vector<8x8xf32> to vector<8x1xf32>
    %295 = vector.broadcast %294 : vector<8x1xf32> to vector<8x16xf32>
    %296 = arith.mulf %293, %295 : vector<8x16xf32>
    %c48_114 = arith.constant 48 : index
    %c0_115 = arith.constant 0 : index
    %297 = vector.load %arg11[%c48_114, %c0_115] : memref<64x16xf32, #tpu.memory_space<vmem>>, vector<8x16xf32>
    tpu.vector_store %arg11[%c48_114, %c0_115], %296 {strides = array<i32>} : memref<64x16xf32, #tpu.memory_space<vmem>>, vector<8x16xf32>,
    %298 = vector.extract_strided_slice %185 {offsets = [0, 48], sizes = [8, 8], strides = [1, 1]} : vector<8x64xf32> to vector<8x8xf32>
    %c48_116 = arith.constant 48 : index
    %c0_117 = arith.constant 0 : index
    %299 = vector.load %arg12[%c48_116, %c0_117] : memref<64x8xf32, #tpu.memory_space<vmem>>, vector<8x8xf32>
    tpu.vector_store %arg12[%c48_116, %c0_117], %298 {strides = array<i32>} : memref<64x8xf32, #tpu.memory_space<vmem>>, vector<8x8xf32>,
    %300 = vector.extract_strided_slice %186 {offsets = [0, 112], sizes = [8, 16], strides = [1, 1]} : vector<8x128xf32> to vector<8x16xf32>
    %cst_118 = arith.constant dense<0xFF800000> : vector<8xf32>
    %301 = vector.multi_reduction <maximumf>, %300, %cst_118 [1] : vector<8x16xf32> to vector<8xf32>
    %302 = vector.shape_cast %301 : vector<8xf32> to vector<8x1xf32>
    %303 = vector.broadcast %302 : vector<8x1xf32> to vector<8x16xf32>
    %304 = arith.subf %300, %303 : vector<8x16xf32>
    %305 = math.exp %304 : vector<8x16xf32>
    %cst_119 = arith.constant dense<0.000000e+00> : vector<8xf32>
    %306 = vector.multi_reduction <add>, %305, %cst_119 [1] : vector<8x16xf32> to vector<8xf32>
    %307 = vector.shape_cast %306 : vector<8xf32> to vector<8x1xf32>
    %308 = vector.broadcast %307 : vector<8x1xf32> to vector<8x16xf32>
    %309 = arith.divf %305, %308 : vector<8x16xf32>
    %310 = vector.extract_strided_slice %187 {offsets = [0, 7], sizes = [8, 1], strides = [1, 1]} : vector<8x8xf32> to vector<8x1xf32>
    %311 = vector.broadcast %310 : vector<8x1xf32> to vector<8x16xf32>
    %312 = arith.mulf %309, %311 : vector<8x16xf32>
    %c56_120 = arith.constant 56 : index
    %c0_121 = arith.constant 0 : index
    %313 = vector.load %arg11[%c56_120, %c0_121] : memref<64x16xf32, #tpu.memory_space<vmem>>, vector<8x16xf32>
    tpu.vector_store %arg11[%c56_120, %c0_121], %312 {strides = array<i32>} : memref<64x16xf32, #tpu.memory_space<vmem>>, vector<8x16xf32>,
    %314 = vector.extract_strided_slice %185 {offsets = [0, 56], sizes = [8, 8], strides = [1, 1]} : vector<8x64xf32> to vector<8x8xf32>
    %c56_122 = arith.constant 56 : index
    %c0_123 = arith.constant 0 : index
    %315 = vector.load %arg12[%c56_122, %c0_123] : memref<64x8xf32, #tpu.memory_space<vmem>>, vector<8x8xf32>
    tpu.vector_store %arg12[%c56_122, %c0_123], %314 {strides = array<i32>} : memref<64x8xf32, #tpu.memory_space<vmem>>, vector<8x8xf32>,
    %c0_124 = arith.constant 0 : index
    %c0_125 = arith.constant 0 : index
    %316 = vector.load %arg11[%c0_124, %c0_125] : memref<64x16xf32, #tpu.memory_space<vmem>>, vector<64x16xf32>
    %c0_126 = arith.constant 0 : index
    %c0_127 = arith.constant 0 : index
    %317 = vector.load %arg12[%c0_126, %c0_127] : memref<64x8xf32, #tpu.memory_space<vmem>>, vector<64x8xf32>
    %cst_128 = arith.constant dense<0.000000e+00> : vector<16xf32>
    %318 = vector.multi_reduction <add>, %316, %cst_128 [0] : vector<64x16xf32> to vector<16xf32>
    %319 = vector.shape_cast %318 : vector<16xf32> to vector<1x16xf32>
    %cst_129 = arith.constant dense<0.000000e+00> : vector<8x16xf32>
    %320 = tpu.matmul %317, %316, %cst_129 {dimension_numbers = #tpu.dot_dimension_numbers<[0], [0], [1], [1], [0, 1, 1, 1], [], []>} : vector<64x8xf32>, vector<64x16xf32>, vector<8x16xf32> -> vector<8x16xf32>
    %321 = vector.broadcast %319 : vector<1x16xf32> to vector<8x16xf32>
    %322 = arith.mulf %321, %21 : vector<8x16xf32>
    %323 = arith.subf %320, %322 : vector<8x16xf32>
    %324 = arith.mulf %323, %323 : vector<8x16xf32>
    %cst_130 = arith.constant dense<0.000000e+00> : vector<16xf32>
    %325 = vector.multi_reduction <add>, %324, %cst_130 [0] : vector<8x16xf32> to vector<16xf32>
    %326 = vector.shape_cast %325 : vector<16xf32> to vector<1x16xf32>
    %cst_131 = arith.constant 1.000000e-24 : f32
    %327 = vector.broadcast %cst_131 : f32 to vector<1x16xf32>
    %328 = arith.maximumf %326, %327 : vector<1x16xf32>
    %329 = math.rsqrt %328 : vector<1x16xf32>
    %330 = vector.broadcast %329 : vector<1x16xf32> to vector<8x16xf32>
    %331 = arith.mulf %323, %330 : vector<8x16xf32>
    %332 = vector.extract_strided_slice %331 {offsets = [0, 0], sizes = [1, 16], strides = [1, 1]} : vector<8x16xf32> to vector<1x16xf32>
    %c1 = arith.constant 1 : index
    %c0_132 = arith.constant 0 : index
    %333 = vector.load %arg13[%c1, %c0_132] : memref<2x128xf32, #tpu.memory_space<vmem>>, vector<1x16xf32>
    tpu.vector_store %arg13[%c1, %c0_132], %332 {strides = array<i32>} : memref<2x128xf32, #tpu.memory_space<vmem>>, vector<1x16xf32>,
    %334 = vector.extract_strided_slice %331 {offsets = [1, 0], sizes = [1, 16], strides = [1, 1]} : vector<8x16xf32> to vector<1x16xf32>
    %c1_133 = arith.constant 1 : index
    %c16_134 = arith.constant 16 : index
    %335 = vector.load %arg13[%c1_133, %c16_134] : memref<2x128xf32, #tpu.memory_space<vmem>>, vector<1x16xf32>
    tpu.vector_store %arg13[%c1_133, %c16_134], %334 {strides = array<i32>} : memref<2x128xf32, #tpu.memory_space<vmem>>, vector<1x16xf32>,
    %336 = vector.extract_strided_slice %331 {offsets = [2, 0], sizes = [1, 16], strides = [1, 1]} : vector<8x16xf32> to vector<1x16xf32>
    %c1_135 = arith.constant 1 : index
    %c32_136 = arith.constant 32 : index
    %337 = vector.load %arg13[%c1_135, %c32_136] : memref<2x128xf32, #tpu.memory_space<vmem>>, vector<1x16xf32>
    tpu.vector_store %arg13[%c1_135, %c32_136], %336 {strides = array<i32>} : memref<2x128xf32, #tpu.memory_space<vmem>>, vector<1x16xf32>,
    %338 = vector.extract_strided_slice %331 {offsets = [3, 0], sizes = [1, 16], strides = [1, 1]} : vector<8x16xf32> to vector<1x16xf32>
    %c1_137 = arith.constant 1 : index
    %c48_138 = arith.constant 48 : index
    %339 = vector.load %arg13[%c1_137, %c48_138] : memref<2x128xf32, #tpu.memory_space<vmem>>, vector<1x16xf32>
    tpu.vector_store %arg13[%c1_137, %c48_138], %338 {strides = array<i32>} : memref<2x128xf32, #tpu.memory_space<vmem>>, vector<1x16xf32>,
    %340 = vector.extract_strided_slice %331 {offsets = [4, 0], sizes = [1, 16], strides = [1, 1]} : vector<8x16xf32> to vector<1x16xf32>
    %c1_139 = arith.constant 1 : index
    %c64_140 = arith.constant 64 : index
    %341 = vector.load %arg13[%c1_139, %c64_140] : memref<2x128xf32, #tpu.memory_space<vmem>>, vector<1x16xf32>
    tpu.vector_store %arg13[%c1_139, %c64_140], %340 {strides = array<i32>} : memref<2x128xf32, #tpu.memory_space<vmem>>, vector<1x16xf32>,
    %342 = vector.extract_strided_slice %331 {offsets = [5, 0], sizes = [1, 16], strides = [1, 1]} : vector<8x16xf32> to vector<1x16xf32>
    %c1_141 = arith.constant 1 : index
    %c80_142 = arith.constant 80 : index
    %343 = vector.load %arg13[%c1_141, %c80_142] : memref<2x128xf32, #tpu.memory_space<vmem>>, vector<1x16xf32>
    tpu.vector_store %arg13[%c1_141, %c80_142], %342 {strides = array<i32>} : memref<2x128xf32, #tpu.memory_space<vmem>>, vector<1x16xf32>,
    %344 = vector.extract_strided_slice %331 {offsets = [6, 0], sizes = [1, 16], strides = [1, 1]} : vector<8x16xf32> to vector<1x16xf32>
    %c1_143 = arith.constant 1 : index
    %c96_144 = arith.constant 96 : index
    %345 = vector.load %arg13[%c1_143, %c96_144] : memref<2x128xf32, #tpu.memory_space<vmem>>, vector<1x16xf32>
    tpu.vector_store %arg13[%c1_143, %c96_144], %344 {strides = array<i32>} : memref<2x128xf32, #tpu.memory_space<vmem>>, vector<1x16xf32>,
    %346 = vector.extract_strided_slice %331 {offsets = [7, 0], sizes = [1, 16], strides = [1, 1]} : vector<8x16xf32> to vector<1x16xf32>
    %c1_145 = arith.constant 1 : index
    %c112_146 = arith.constant 112 : index
    %347 = vector.load %arg13[%c1_145, %c112_146] : memref<2x128xf32, #tpu.memory_space<vmem>>, vector<1x16xf32>
    tpu.vector_store %arg13[%c1_145, %c112_146], %346 {strides = array<i32>} : memref<2x128xf32, #tpu.memory_space<vmem>>, vector<1x16xf32>,
    %c0_147 = arith.constant 0 : index
    %c0_148 = arith.constant 0 : index
    %348 = vector.load %arg13[%c0_147, %c0_148] : memref<2x128xf32, #tpu.memory_space<vmem>>, vector<2x128xf32>
    %c0_149 = arith.constant 0 : index
    %c0_150 = arith.constant 0 : index
    %349 = vector.load %arg8[%c0_149, %c0_150] : memref<128x64xf32, #tpu.memory_space<vmem>>, vector<128x64xf32>
    %cst_151 = arith.constant dense<0.000000e+00> : vector<2x64xf32>
    %350 = tpu.matmul %348, %349, %cst_151 {dimension_numbers = #tpu.dot_dimension_numbers<[1], [0], [0], [1], [0, 0, 1, 1], [], []>} : vector<2x128xf32>, vector<128x64xf32>, vector<2x64xf32> -> vector<2x64xf32>
    %c0_152 = arith.constant 0 : index
    %c0_153 = arith.constant 0 : index
    %351 = vector.load %arg9[%c0_152, %c0_153] : memref<1x64xf32, #tpu.memory_space<vmem>>, vector<1x64xf32>
    %352 = vector.broadcast %351 : vector<1x64xf32> to vector<2x64xf32>
    %353 = arith.addf %350, %352 : vector<2x64xf32>
    %c0_154 = arith.constant 0 : index
    %c0_155 = arith.constant 0 : index
    %354 = vector.load %arg10[%c0_154, %c0_155] : memref<2x64xf32, #tpu.memory_space<vmem>>, vector<2x64xf32>
    tpu.vector_store %arg10[%c0_154, %c0_155], %353 {strides = array<i32>} : memref<2x64xf32, #tpu.memory_space<vmem>>, vector<2x64xf32>,
    return
  }
  func.func @transform_0(%arg0: i32) -> (i32, i32) {
    %c0_i32 = arith.constant 0 : i32
    %c0_i32_0 = arith.constant 0 : i32
    %c0_i32_1 = arith.constant 0 : i32
    return %c0_i32, %c0_i32_0 : i32, i32
  }
  func.func @transform_1(%arg0: i32) -> (i32, i32) {
    %c0_i32 = arith.constant 0 : i32
    %c0_i32_0 = arith.constant 0 : i32
    %c0_i32_1 = arith.constant 0 : i32
    return %c0_i32, %c0_i32_0 : i32, i32
  }
  func.func @transform_2(%arg0: i32) -> (i32, i32) {
    %c0_i32 = arith.constant 0 : i32
    %c0_i32_0 = arith.constant 0 : i32
    %c0_i32_1 = arith.constant 0 : i32
    return %c0_i32, %c0_i32_0 : i32, i32
  }
  func.func @transform_3(%arg0: i32) -> (i32, i32) {
    %c0_i32 = arith.constant 0 : i32
    %c0_i32_0 = arith.constant 0 : i32
    %c0_i32_1 = arith.constant 0 : i32
    return %c0_i32, %c0_i32_0 : i32, i32
  }
  func.func @transform_4(%arg0: i32) -> (i32, i32) {
    %c0_i32 = arith.constant 0 : i32
    %c0_i32_0 = arith.constant 0 : i32
    %c0_i32_1 = arith.constant 0 : i32
    return %c0_i32, %c0_i32_0 : i32, i32
  }
  func.func @transform_5(%arg0: i32) -> (i32, i32) {
    %c0_i32 = arith.constant 0 : i32
    %c0_i32_0 = arith.constant 0 : i32
    %c0_i32_1 = arith.constant 0 : i32
    return %c0_i32, %c0_i32_0 : i32, i32
  }
  func.func @transform_6(%arg0: i32) -> (i32, i32) {
    %c0_i32 = arith.constant 0 : i32
    %c0_i32_0 = arith.constant 0 : i32
    %c0_i32_1 = arith.constant 0 : i32
    return %c0_i32, %c0_i32_0 : i32, i32
  }
  func.func @transform_7(%arg0: i32) -> (i32, i32) {
    %c0_i32 = arith.constant 0 : i32
    %c0_i32_0 = arith.constant 0 : i32
    %c0_i32_1 = arith.constant 0 : i32
    return %c0_i32, %c0_i32_0 : i32, i32
  }
  func.func @transform_8(%arg0: i32) -> (i32, i32) {
    %c0_i32 = arith.constant 0 : i32
    %c0_i32_0 = arith.constant 0 : i32
    %c0_i32_1 = arith.constant 0 : i32
    return %c0_i32, %c0_i32_0 : i32, i32
  }
  func.func @transform_9(%arg0: i32) -> (i32, i32) {
    %c0_i32 = arith.constant 0 : i32
    %c0_i32_0 = arith.constant 0 : i32
    %c0_i32_1 = arith.constant 0 : i32
    return %c0_i32, %c0_i32_0 : i32, i32
  }
}

</mosaic_0001>

<llo_original>
// kernel: nextvlad_pallas.1
$region0: #{nextvlad_pallas.1}
  #allocation0 [shape = 'u32[]', space=smem, size = 0x4, offset = 0x4, fixed_abs, tag = 'smem constant byte address 0x4 - core index']
  #allocation1 [shape = 'u32[144,128]{1,0:T(1,128)}', space=vmem, size = 0x12000, scoped, tag = 'internal scratch']
  #allocation2 [shape = 'f32[64,16]{1,0:T(8,128)}', space=vmem, size = 0x8000, scoped, tag = 'scratch operand']
  #allocation3 [shape = 'f32[64,8]{1,0:T(8,128)}', space=vmem, size = 0x8000, scoped, tag = 'scratch operand']
  #allocation4 [shape = 'f32[2,128]{1,0:T(2,128)}', space=vmem, size = 0x400, scoped, tag = 'scratch operand']
  %s0 = inlined_call_operand.vmem [shape: f32[16,32], index: 0, kind: input, shape index: {}]
  %s1 = inlined_call_operand.vmem [shape: f32[16,1], index: 1, kind: input, shape index: {}]
  %s2 = inlined_call_operand.vmem [shape: f32[32,64], index: 2, kind: input, shape index: {}]
  %s3 = inlined_call_operand.vmem [shape: f32[1,64], index: 3, kind: input, shape index: {}]
  %s4 = inlined_call_operand.vmem [shape: f32[64,256], index: 4, kind: input, shape index: {}]
  %s5 = inlined_call_operand.vmem [shape: f32[1,256], index: 5, kind: input, shape index: {}]
  %s6 = inlined_call_operand.vmem [shape: f32[8,16], index: 6, kind: input, shape index: {}]
  %s7 = inlined_call_operand.vmem [shape: f32[128,64], index: 7, kind: input, shape index: {}]
  %s8 = inlined_call_operand.vmem [shape: f32[1,64], index: 8, kind: input, shape index: {}]
  %s9 = inlined_call_operand.hbm [shape: f32[2,64], index: 9, kind: output, shape index: {}]
  %s10 = sld [smem:[#allocation0]]
  $region46: #{nextvlad_pallas.1} parent=0
    _
  %s12 = ssub.s32 1, %s10
  %s13 = scalar_select 0, %s12, %s10
  $region1: #{nextvlad_pallas.1} parent=0
    #allocation5 [shape = 'u8[1024]{0}', space=vmem, size = 0x400, scoped, tag = 'output window, operand 0, single buffered']
    #allocation6 [shape = 's32[1]{0}', space=sflag, size = 0x4, scoped, tag = 'scoped memory for nextvlad_pallas.1']
    %14 = vsyncpa [#allocation6], 0
    // Predicated region
    $region2: #{nextvlad_pallas.1} parent=1 // pred_check
      _
    $region3: #{nextvlad_pallas.1} parent=1 // pred_check_branch
      %16 = sbr.rel (0) target = $region5
    $region4: #{nextvlad_pallas.1} parent=1 // pred_region
      _
    $region5: #{nextvlad_pallas.1} parent=1 // pred_fallthru
      _
    // Predicated region
    $region6: #{nextvlad_pallas.1} parent=1 // pred_check
      _
    $region7: #{nextvlad_pallas.1} parent=1 // pred_check_branch
      %18 = sbr.rel (0) target = $region9
    $region8: #{nextvlad_pallas.1} parent=1 // pred_region
      _
    $region9: #{nextvlad_pallas.1} parent=1 // pred_fallthru
      _
    // Predicated region
    $region10: #{nextvlad_pallas.1} parent=1 // pred_check
      _
    $region11: #{nextvlad_pallas.1} parent=1 // pred_check_branch
      %20 = sbr.rel (0) target = $region13
    $region12: #{nextvlad_pallas.1} parent=1 // pred_region
      _
    $region13: #{nextvlad_pallas.1} parent=1 // pred_fallthru
      _
    // Predicated region
    $region14: #{nextvlad_pallas.1} parent=1 // pred_check
      _
    $region15: #{nextvlad_pallas.1} parent=1 // pred_check_branch
      %22 = sbr.rel (0) target = $region17
    $region16: #{nextvlad_pallas.1} parent=1 // pred_region
      _
    $region17: #{nextvlad_pallas.1} parent=1 // pred_fallthru
      _
    // Predicated region
    $region18: #{nextvlad_pallas.1} parent=1 // pred_check
      _
    $region19: #{nextvlad_pallas.1} parent=1 // pred_check_branch
      %24 = sbr.rel (0) target = $region21
    $region20: #{nextvlad_pallas.1} parent=1 // pred_region
      _
    $region21: #{nextvlad_pallas.1} parent=1 // pred_fallthru
      _
    // Predicated region
    $region22: #{nextvlad_pallas.1} parent=1 // pred_check
      _
    $region23: #{nextvlad_pallas.1} parent=1 // pred_check_branch
      %26 = sbr.rel (0) target = $region25
    $region24: #{nextvlad_pallas.1} parent=1 // pred_region
      _
    $region25: #{nextvlad_pallas.1} parent=1 // pred_fallthru
      _
    // Predicated region
    $region26: #{nextvlad_pallas.1} parent=1 // pred_check
      _
    $region27: #{nextvlad_pallas.1} parent=1 // pred_check_branch
      %28 = sbr.rel (0) target = $region29
    $region28: #{nextvlad_pallas.1} parent=1 // pred_region
      _
    $region29: #{nextvlad_pallas.1} parent=1 // pred_fallthru
      _
    // Predicated region
    $region30: #{nextvlad_pallas.1} parent=1 // pred_check
      _
    $region31: #{nextvlad_pallas.1} parent=1 // pred_check_branch
      %30 = sbr.rel (0) target = $region33
    $region32: #{nextvlad_pallas.1} parent=1 // pred_region
      _
    $region33: #{nextvlad_pallas.1} parent=1 // pred_fallthru
      _
    // Predicated region
    $region34: #{nextvlad_pallas.1} parent=1 // pred_check
      _
    $region35: #{nextvlad_pallas.1} parent=1 // pred_check_branch
      %32 = sbr.rel (0) target = $region37
    $region36: #{nextvlad_pallas.1} parent=1 // pred_region
      _
    $region37: #{nextvlad_pallas.1} parent=1 // pred_fallthru
      _
    %v33 = vld [vmem:[%s0] sm:$0xff]
    %v34 = vld [vmem:[%s0 + $0x8] sm:$0xff]
    %v35 = vld [vmem:[%s2] sm:$0xff]
    %v36 = vld [vmem:[%s2 + $0x8] sm:$0xff]
    %v37 = vld [vmem:[%s2 + $0x10] sm:$0xff]
    %v38 = vld [vmem:[%s2 + $0x18] sm:$0xff]
    %v39 = vld [vmem:[%s3] sm:$0x1]
    %v41 = vlaneseq
    %v42 = vshrl.u32 %v41, 7
    %v43 = vsub.s32 0, %v42
    %v44 = vrot.slane %v39, %v43
    %vm46 = vcmask 261120
    %v48 = vsel %vm46, %v33, 0
    %v51 = vsel %vm46, %v34, 0
    %53 = vmatprep.subr.mxu0 0.0
    %54 = vmatpush1.msra.mxu0 %v35
    %55 = vmatprep.subr.mxu0 0.0
    %56 = vmatpush1.msra.mxu0 %v36
    %57 = vmatprep.subr.mxu0 0.0
    %58 = vmatpush1.msra.mxu0 %v37
    %59 = vmatprep.subr.mxu0 0.0
    %60 = vmatpush1.msra.mxu0 %v38
    %61 = vmatprep.subr.mxu0 0.0
    %62 = vmatpush1.msra.mxu0 0.0
    %63 = vmatprep.subr.mxu0 0.0
    %64 = vmatpush1.msra.mxu0 0.0
    %65 = vmatprep.subr.mxu0 0.0
    %66 = vmatpush1.msra.mxu0 0.0
    %67 = vmatprep.subr.mxu0 0.0
    %68 = vmatpush1.msra.mxu0 0.0
    %69 = vmatprep.subr.mxu0 0.0
    %70 = vmatpush1.msra.mxu0 0.0
    %71 = vmatprep.subr.mxu0 0.0
    %72 = vmatpush1.msra.mxu0 0.0
    %73 = vmatprep.subr.mxu0 0.0
    %74 = vmatpush1.msra.mxu0 0.0
    %75 = vmatprep.subr.mxu0 0.0
    %76 = vmatpush1.msra.mxu0 0.0
    %77 = vmatprep.subr.mxu0 0.0
    %78 = vmatpush1.msra.mxu0 0.0
    %79 = vmatprep.subr.mxu0 0.0
    %80 = vmatpush1.msra.mxu0 0.0
    %81 = vmatprep.subr.mxu0 0.0
    %82 = vmatpush1.msra.mxu0 0.0
    %83 = vmatprep.subr.mxu0 0.0
    %84 = vmatpush1.msra.mxu0 0.0
    %85 = vmatprep.subr.mxu0 0.0
    %86 = vmatpush1.msra.mxu0 0.0
    %87 = vmatprep.subr.mxu0 0.0
    %88 = vmatpush1.msra.mxu0 0.0
    %89 = vmatprep.subr.mxu0 0.0
    %90 = vmatpush1.msra.mxu0 0.0
    %91 = vmatprep.subr.mxu0 0.0
    %92 = vmatpush1.msra.mxu0 0.0
    %93 = vmatprep.subr.mxu0 0.0
    %94 = vmatpush1.msra.mxu0 0.0
    %95 = vmatprep.subr.mxu0 0.0
    %96 = vmatpush1.msra.mxu0 0.0
    %97 = vmatprep.subr.mxu0 0.0
    %98 = vmatpush1.msra.mxu0 0.0
    %99 = vmatprep.subr.mxu0 0.0
    %100 = vmatpush1.msra.mxu0 0.0
    %101 = vmatprep.subr.mxu0 0.0
    %102 = vmatpush1.msra.mxu0 0.0
    %103 = vmatprep.subr.mxu0 0.0
    %104 = vmatpush1.msra.mxu0 0.0
    %105 = vmatprep.subr.mxu0 0.0
    %106 = vmatpush1.msra.mxu0 0.0
    %107 = vmatprep.subr.mxu0 0.0
    %108 = vmatpush1.msra.mxu0 0.0
    %109 = vmatprep.subr.mxu0 0.0
    %110 = vmatpush1.msra.mxu0 0.0
    %111 = vmatprep.subr.mxu0 0.0
    %112 = vmatpush1.msra.mxu0 0.0
    %113 = vmatprep.subr.mxu0 0.0
    %114 = vmatpush1.msra.mxu0 0.0
    %115 = vmatprep.subr.mxu0 0.0
    %116 = vmatpush1.msra.mxu0 0.0
    %117 = vmatprep.mubr.f32.mxu0 0.0
    %118 = vmatmul.mubr.f32.gmra.mrb[0].mxu0 %v48
    %v119 = vpop.f32.mrb[0].mxu0
    %v120 = vadd.f32 %v44, %v119
    %v121 = vpop.f32.mrb[0].mxu0
    %122 = vmatprep.mubr.f32.mxu0 0.0
    %123 = vmatmul.mubr.f32.gmra.mrb[0].mxu0 %v51
    %v124 = vpop.f32.mrb[0].mxu0
    %v125 = vadd.f32 %v44, %v124
    %v126 = vpop.f32.mrb[0].mxu0
    %127 = vdwg.mxu0
    %v128 = vld [vmem:[%s4] sm:$0xff]
    %v129 = vld [vmem:[%s4 + $0x8] sm:$0xff]
    %v130 = vld [vmem:[%s4 + $0x10] sm:$0xff]
    %v131 = vld [vmem:[%s4 + $0x18] sm:$0xff]
    %v132 = vld [vmem:[%s4 + $0x20] sm:$0xff]
    %v133 = vld [vmem:[%s4 + $0x28] sm:$0xff]
    %v134 = vld [vmem:[%s4 + $0x30] sm:$0xff]
    %v135 = vld [vmem:[%s4 + $0x38] sm:$0xff]
    %v136 = vld [vmem:[%s4 + $0x40] sm:$0xff]
    %v137 = vld [vmem:[%s4 + $0x48] sm:$0xff]
    %v138 = vld [vmem:[%s4 + $0x50] sm:$0xff]
    %v139 = vld [vmem:[%s4 + $0x58] sm:$0xff]
    %v140 = vld [vmem:[%s4 + $0x60] sm:$0xff]
    %v141 = vld [vmem:[%s4 + $0x68] sm:$0xff]
    %v142 = vld [vmem:[%s4 + $0x70] sm:$0xff]
    %v143 = vld [vmem:[%s4 + $0x78] sm:$0xff]
    %v144 = vld [vmem:[%s5] sm:$0x3]
    %v146 = vlaneseq
    %v147 = vshrl.u32 %v146, 7
    %v148 = vsub.s32 0, %v147
    %v149 = vrot.slane %v144, %v148
    %v150 = vlaneseq
    %v151 = vshrl.u32 %v150, 7
    %v152 = vsub.s32 1, %v151
    %v153 = vrot.slane %v144, %v152
    %vm156 = vcmask 523264
    %v158 = vsel %vm156, %v120, 0
    %v161 = vsel %vm156, %v125, 0
    %163 = vmatprep.subr.mxu0 %v129
    %164 = vmatpush1.msra.mxu0 %v128
    %165 = vmatprep.subr.mxu0 %v131
    %166 = vmatpush1.msra.mxu0 %v130
    %167 = vmatprep.subr.mxu0 %v133
    %168 = vmatpush1.msra.mxu0 %v132
    %169 = vmatprep.subr.mxu0 %v135
    %170 = vmatpush1.msra.mxu0 %v134
    %171 = vmatprep.subr.mxu0 %v137
    %172 = vmatpush1.msra.mxu0 %v136
    %173 = vmatprep.subr.mxu0 %v139
    %174 = vmatpush1.msra.mxu0 %v138
    %175 = vmatprep.subr.mxu0 %v141
    %176 = vmatpush1.msra.mxu0 %v140
    %177 = vmatprep.subr.mxu0 %v143
    %178 = vmatpush1.msra.mxu0 %v142
    %179 = vmatprep.subr.mxu0 0.0
    %180 = vmatpush1.msra.mxu0 0.0
    %181 = vmatprep.subr.mxu0 0.0
    %182 = vmatpush1.msra.mxu0 0.0
    %183 = vmatprep.subr.mxu0 0.0
    %184 = vmatpush1.msra.mxu0 0.0
    %185 = vmatprep.subr.mxu0 0.0
    %186 = vmatpush1.msra.mxu0 0.0
    %187 = vmatprep.subr.mxu0 0.0
    %188 = vmatpush1.msra.mxu0 0.0
    %189 = vmatprep.subr.mxu0 0.0
    %190 = vmatpush1.msra.mxu0 0.0
    %191 = vmatprep.subr.mxu0 0.0
    %192 = vmatpush1.msra.mxu0 0.0
    %193 = vmatprep.subr.mxu0 0.0
    %194 = vmatpush1.msra.mxu0 0.0
    %195 = vmatprep.subr.mxu0 0.0
    %196 = vmatpush1.msra.mxu0 0.0
    %197 = vmatprep.subr.mxu0 0.0
    %198 = vmatpush1.msra.mxu0 0.0
    %199 = vmatprep.subr.mxu0 0.0
    %200 = vmatpush1.msra.mxu0 0.0
    %201 = vmatprep.subr.mxu0 0.0
    %202 = vmatpush1.msra.mxu0 0.0
    %203 = vmatprep.subr.mxu0 0.0
    %204 = vmatpush1.msra.mxu0 0.0
    %205 = vmatprep.subr.mxu0 0.0
    %206 = vmatpush1.msra.mxu0 0.0
    %207 = vmatprep.subr.mxu0 0.0
    %208 = vmatpush1.msra.mxu0 0.0
    %209 = vmatprep.subr.mxu0 0.0
    %210 = vmatpush1.msra.mxu0 0.0
    %211 = vmatprep.subr.mxu0 0.0
    %212 = vmatpush1.msra.mxu0 0.0
    %213 = vmatprep.subr.mxu0 0.0
    %214 = vmatpush1.msra.mxu0 0.0
    %215 = vmatprep.subr.mxu0 0.0
    %216 = vmatpush1.msra.mxu0 0.0
    %217 = vmatprep.subr.mxu0 0.0
    %218 = vmatpush1.msra.mxu0 0.0
    %219 = vmatprep.subr.mxu0 0.0
    %220 = vmatpush1.msra.mxu0 0.0
    %221 = vmatprep.subr.mxu0 0.0
    %222 = vmatpush1.msra.mxu0 0.0
    %223 = vmatprep.subr.mxu0 0.0
    %224 = vmatpush1.msra.mxu0 0.0
    %225 = vmatprep.subr.mxu0 0.0
    %226 = vmatpush1.msra.mxu0 0.0
    %227 = vmatprep.mubr.f32.mxu0 0.0
    %228 = vmatmul.mubr.f32.gmra.mrb[0].mxu0 %v158
    %v229 = vpop.f32.mrb[0].mxu0
    %v230 = vadd.f32 %v149, %v229
    %v231 = vpop.f32.mrb[0].mxu0
    %v232 = vadd.f32 %v153, %v231
    %233 = vmatprep.mubr.f32.mxu0 0.0
    %234 = vmatmul.mubr.f32.gmra.mrb[0].mxu0 %v161
    %v235 = vpop.f32.mrb[0].mxu0
    %v236 = vadd.f32 %v149, %v235
    %v237 = vpop.f32.mrb[0].mxu0
    %v238 = vadd.f32 %v153, %v237
    %239 = vdwg.mxu0
    %v240 = vxor.u32 %v232, 2147483648
    %v241 = vxor.u32 %v238, 2147483648
    %v242 = vmul.f32 %v240, 1.442695
    %v243 = vpow.pop %v242
    %v244 = vmul.f32 %v241, 1.442695
    %v245 = vpow.pop %v244
    %v246 = vadd.f32 %v243, 1.0
    %v247 = vadd.f32 %v245, 1.0
    %v248 = vrcp.pop %v246
    %v249 = vmul.f32 1.0, %v248
    %v250 = vrcp.pop %v247
    %v251 = vmul.f32 1.0, %v250
    %v252 = vld [vmem:[%s1] sm:$0xff]
    %v253 = vld [vmem:[%s1 + $0x8] sm:$0xff]
    %255 = vset.pattern.permute.xlu0 0
    %256 = vperm.xlu0 %255, %v252
    %v257 = vpop.permute.xlu0 %256
    %260 = vset.pattern.permute.xlu0 0
    %261 = vperm.xlu0 %260, %v253
    %v262 = vpop.permute.xlu0 %261
    %v264 = vmul.f32 %v249, %v257
    %v265 = vmul.f32 %v251, %v262
    %v266 = vld [vmem:[%s6] sm:$0xff]
    %vm267 = vcmask 130048
    %v268 = vsel %vm267, %v230, -inf
    %269 = vmax.xlane.f32.xlu0 %v268
    %v270 = vpop.xlane.xlu0 %269
    %v271 = vsub.f32 %v230, %v270
    %v272 = vmul.f32 %v271, 1.442695
    %v273 = vpow.pop %v272
    %v274 = vsel %vm267, %v273, 0.0
    %275 = vadd.xlane.f32.xlu0 %v274
    %v276 = vpop.xlane.xlu0 %275
    %v277 = vrcp.pop %v276
    %v278 = vmul.f32 %v273, %v277
    %280 = vset.pattern.permute.xlu0 0
    %281 = vperm.xlu0 %280, %v264
    %v282 = vpop.permute.xlu0 %281
    %v284 = vmul.f32 %v278, %v282
    %285 = vst.msk [vmem:[#allocation2] sm:$0xff] %vm267, %v284
    %vm286 = vcmask 64512
    %287 = vst.msk [vmem:[#allocation3] sm:$0xff] %vm286, %v120
    %vm288 = vcmask 261248
    %v289 = vsel %vm288, %v230, -inf
    %290 = vmax.xlane.f32.xlu0 %v289
    %v291 = vpop.xlane.xlu0 %290
    %v292 = vsub.f32 %v230, %v291
    %v293 = vmul.f32 %v292, 1.442695
    %v294 = vpow.pop %v293
    %296 = vrot.lane.b32.xlu0 %v294, 112
    %v297 = vpop.permute.xlu0 %296
    %v299 = vsel %vm267, %v297, 0.0
    %300 = vadd.xlane.f32.xlu0 %v299
    %v301 = vpop.xlane.xlu0 %300
    %v302 = vrcp.pop %v301
    %v303 = vmul.f32 %v294, %v302
    %304 = vset.pattern.permute.xlu0 1
    %305 = vperm.xlu0 %304, %v264
    %v306 = vpop.permute.xlu0 %305
    %v308 = vmul.f32 %v303, %v306
    %310 = vrot.lane.b32.xlu0 %v308, 112
    %v311 = vpop.permute.xlu0 %310
    %313 = vst.msk [vmem:[#allocation2 + $0x8] sm:$0xff] %vm267, %v311
    %314 = vrot.lane.b32.xlu0 %v120, 120
    %v315 = vpop.permute.xlu0 %314
    %317 = vst.msk [vmem:[#allocation3 + $0x8] sm:$0xff] %vm286, %v315
    %vm318 = vcmask 392448
    %v319 = vsel %vm318, %v230, -inf
    %320 = vmax.xlane.f32.xlu0 %v319
    %v321 = vpop.xlane.xlu0 %320
    %v322 = vsub.f32 %v230, %v321
    %v323 = vmul.f32 %v322, 1.442695
    %v324 = vpow.pop %v323
    %326 = vrot.lane.b32.xlu0 %v324, 96
    %v327 = vpop.permute.xlu0 %326
    %v329 = vsel %vm267, %v327, 0.0
    %330 = vadd.xlane.f32.xlu0 %v329
    %v331 = vpop.xlane.xlu0 %330
    %v332 = vrcp.pop %v331
    %v333 = vmul.f32 %v324, %v332
    %334 = vset.pattern.permute.xlu0 2
    %335 = vperm.xlu0 %334, %v264
    %v336 = vpop.permute.xlu0 %335
    %v338 = vmul.f32 %v333, %v336
    %340 = vrot.lane.b32.xlu0 %v338, 96
    %v341 = vpop.permute.xlu0 %340
    %343 = vst.msk [vmem:[#allocation2 + $0x10] sm:$0xff] %vm267, %v341
    %344 = vrot.lane.b32.xlu0 %v120, 112
    %v345 = vpop.permute.xlu0 %344
    %347 = vst.msk [vmem:[#allocation3 + $0x10] sm:$0xff] %vm286, %v345
    %vm348 = vcmask 523648
    %v349 = vsel %vm348, %v230, -inf
    %350 = vmax.xlane.f32.xlu0 %v349
    %v351 = vpop.xlane.xlu0 %350
    %v352 = vsub.f32 %v230, %v351
    %v353 = vmul.f32 %v352, 1.442695
    %v354 = vpow.pop %v353
    %356 = vrot.lane.b32.xlu0 %v354, 80
    %v357 = vpop.permute.xlu0 %356
    %v359 = vsel %vm267, %v357, 0.0
    %360 = vadd.xlane.f32.xlu0 %v359
    %v361 = vpop.xlane.xlu0 %360
    %v362 = vrcp.pop %v361
    %v363 = vmul.f32 %v354, %v362
    %364 = vset.pattern.permute.xlu0 3
    %365 = vperm.xlu0 %364, %v264
    %v366 = vpop.permute.xlu0 %365
    %v368 = vmul.f32 %v363, %v366
    %370 = vrot.lane.b32.xlu0 %v368, 80
    %v371 = vpop.permute.xlu0 %370
    %373 = vst.msk [vmem:[#allocation2 + $0x18] sm:$0xff] %vm267, %v371
    %374 = vrot.lane.b32.xlu0 %v120, 104
    %v375 = vpop.permute.xlu0 %374
    %377 = vst.msk [vmem:[#allocation3 + $0x18] sm:$0xff] %vm286, %v375
    %vm378 = vcmask 654848
    %v379 = vsel %vm378, %v230, -inf
    %380 = vmax.xlane.f32.xlu0 %v379
    %v381 = vpop.xlane.xlu0 %380
    %v382 = vsub.f32 %v230, %v381
    %v383 = vmul.f32 %v382, 1.442695
    %v384 = vpow.pop %v383
    %386 = vrot.lane.b32.xlu0 %v384, 64
    %v387 = vpop.permute.xlu0 %386
    %v389 = vsel %vm267, %v387, 0.0
    %390 = vadd.xlane.f32.xlu0 %v389
    %v391 = vpop.xlane.xlu0 %390
    %v392 = vrcp.pop %v391
    %v393 = vmul.f32 %v384, %v392
    %394 = vset.pattern.permute.xlu0 4
    %395 = vperm.xlu0 %394, %v264
    %v396 = vpop.permute.xlu0 %395
    %v398 = vmul.f32 %v393, %v396
    %400 = vrot.lane.b32.xlu0 %v398, 64
    %v401 = vpop.permute.xlu0 %400
    %403 = vst.msk [vmem:[#allocation2 + $0x20] sm:$0xff] %vm267, %v401
    %404 = vrot.lane.b32.xlu0 %v120, 96
    %v405 = vpop.permute.xlu0 %404
    %407 = vst.msk [vmem:[#allocation3 + $0x20] sm:$0xff] %vm286, %v405
    %vm408 = vcmask 786048
    %v409 = vsel %vm408, %v230, -inf
    %410 = vmax.xlane.f32.xlu0 %v409
    %v411 = vpop.xlane.xlu0 %410
    %v412 = vsub.f32 %v230, %v411
    %v413 = vmul.f32 %v412, 1.442695
    %v414 = vpow.pop %v413
    %416 = vrot.lane.b32.xlu0 %v414, 48
    %v417 = vpop.permute.xlu0 %416
    %v419 = vsel %vm267, %v417, 0.0
    %420 = vadd.xlane.f32.xlu0 %v419
    %v421 = vpop.xlane.xlu0 %420
    %v422 = vrcp.pop %v421
    %v423 = vmul.f32 %v414, %v422
    %424 = vset.pattern.permute.xlu0 5
    %425 = vperm.xlu0 %424, %v264
    %v426 = vpop.permute.xlu0 %425
    %v428 = vmul.f32 %v423, %v426
    %430 = vrot.lane.b32.xlu0 %v428, 48
    %v431 = vpop.permute.xlu0 %430
    %433 = vst.msk [vmem:[#allocation2 + $0x28] sm:$0xff] %vm267, %v431
    %434 = vrot.lane.b32.xlu0 %v120, 88
    %v435 = vpop.permute.xlu0 %434
    %437 = vst.msk [vmem:[#allocation3 + $0x28] sm:$0xff] %vm286, %v435
    %vm438 = vcmask 917248
    %v439 = vsel %vm438, %v230, -inf
    %440 = vmax.xlane.f32.xlu0 %v439
    %v441 = vpop.xlane.xlu0 %440
    %v442 = vsub.f32 %v230, %v441
    %v443 = vmul.f32 %v442, 1.442695
    %v444 = vpow.pop %v443
    %446 = vrot.lane.b32.xlu0 %v444, 32
    %v447 = vpop.permute.xlu0 %446
    %v449 = vsel %vm267, %v447, 0.0
    %450 = vadd.xlane.f32.xlu0 %v449
    %v451 = vpop.xlane.xlu0 %450
    %v452 = vrcp.pop %v451
    %v453 = vmul.f32 %v444, %v452
    %454 = vset.pattern.permute.xlu0 6
    %455 = vperm.xlu0 %454, %v264
    %v456 = vpop.permute.xlu0 %455
    %v458 = vmul.f32 %v453, %v456
    %460 = vrot.lane.b32.xlu0 %v458, 32
    %v461 = vpop.permute.xlu0 %460
    %463 = vst.msk [vmem:[#allocation2 + $0x30] sm:$0xff] %vm267, %v461
    %464 = vrot.lane.b32.xlu0 %v120, 80
    %v465 = vpop.permute.xlu0 %464
    %467 = vst.msk [vmem:[#allocation3 + $0x30] sm:$0xff] %vm286, %v465
    %vm468 = vcmask 1048448
    %v469 = vsel %vm468, %v230, -inf
    %470 = vmax.xlane.f32.xlu0 %v469
    %v471 = vpop.xlane.xlu0 %470
    %v472 = vsub.f32 %v230, %v471
    %v473 = vmul.f32 %v472, 1.442695
    %v474 = vpow.pop %v473
    %476 = vrot.lane.b32.xlu0 %v474, 16
    %v477 = vpop.permute.xlu0 %476
    %v479 = vsel %vm267, %v477, 0.0
    %480 = vadd.xlane.f32.xlu0 %v479
    %v481 = vpop.xlane.xlu0 %480
    %v482 = vrcp.pop %v481
    %v483 = vmul.f32 %v474, %v482
    %484 = vset.pattern.permute.xlu0 7
    %485 = vperm.xlu0 %484, %v264
    %v486 = vpop.permute.xlu0 %485
    %v488 = vmul.f32 %v483, %v486
    %490 = vrot.lane.b32.xlu0 %v488, 16
    %v491 = vpop.permute.xlu0 %490
    %493 = vst.msk [vmem:[#allocation2 + $0x38] sm:$0xff] %vm267, %v491
    %494 = vrot.lane.b32.xlu0 %v120, 72
    %v495 = vpop.permute.xlu0 %494
    %497 = vst.msk [vmem:[#allocation3 + $0x38] sm:$0xff] %vm286, %v495
    %v498 = vld [vmem:[#allocation2] sm:$0xff]
    %v499 = vld [vmem:[#allocation2 + $0x8] sm:$0xff]
    %v500 = vld [vmem:[#allocation2 + $0x10] sm:$0xff]
    %v501 = vld [vmem:[#allocation2 + $0x18] sm:$0xff]
    %v502 = vld [vmem:[#allocation2 + $0x20] sm:$0xff]
    %v503 = vld [vmem:[#allocation2 + $0x28] sm:$0xff]
    %v504 = vld [vmem:[#allocation2 + $0x30] sm:$0xff]
    %v505 = vld [vmem:[#allocation2 + $0x38] sm:$0xff]
    %v506 = vld [vmem:[#allocation3] sm:$0xff]
    %v507 = vld [vmem:[#allocation3 + $0x8] sm:$0xff]
    %v508 = vld [vmem:[#allocation3 + $0x10] sm:$0xff]
    %v509 = vld [vmem:[#allocation3 + $0x18] sm:$0xff]
    %v510 = vld [vmem:[#allocation3 + $0x20] sm:$0xff]
    %v511 = vld [vmem:[#allocation3 + $0x28] sm:$0xff]
    %v512 = vld [vmem:[#allocation3 + $0x30] sm:$0xff]
    %v513 = vld [vmem:[#allocation3 + $0x38] sm:$0xff]
    %v514 = vsel %vm267, %v498, 0.0
    %v515 = vsel %vm267, %v499, 0.0
    %v516 = vadd.f32 %v514, %v515
    %v517 = vsel %vm267, %v500, 0.0
    %v518 = vadd.f32 %v516, %v517
    %v519 = vsel %vm267, %v501, 0.0
    %v520 = vadd.f32 %v518, %v519
    %v521 = vsel %vm267, %v502, 0.0
    %v522 = vadd.f32 %v520, %v521
    %v523 = vsel %vm267, %v503, 0.0
    %v524 = vadd.f32 %v522, %v523
    %v525 = vsel %vm267, %v504, 0.0
    %v526 = vadd.f32 %v524, %v525
    %v527 = vsel %vm267, %v505, 0.0
    %v528 = vadd.f32 %v526, %v527
    %v529 = vrot.slane %v528, 4
    %v530 = vadd.f32 %v528, %v529
    %v531 = vrot.slane %v530, 2
    %v532 = vadd.f32 %v530, %v531
    %v533 = vrot.slane %v532, 1
    %v534 = vadd.f32 %v532, %v533
    %535 = vxpose.xlu0.b32.start [1/16] %v506, 128
    %536 = vxpose.xlu0.b32.cont [2/16] %v507, 128
    %537 = vxpose.xlu0.b32.cont [3/16] %v508, 128
    %538 = vxpose.xlu0.b32.cont [4/16] %v509, 128
    %539 = vxpose.xlu0.b32.cont [5/16] %v510, 128
    %540 = vxpose.xlu0.b32.cont [6/16] %v511, 128
    %541 = vxpose.xlu0.b32.cont [7/16] %v512, 128
    %542 = vxpose.xlu0.b32.cont [8/16] %v513, 128
    %543 = vxpose.xlu0.b32.cont [9/16] 0.0, 128
    %544 = vxpose.xlu0.b32.cont [10/16] 0.0, 128
    %545 = vxpose.xlu0.b32.cont [11/16] 0.0, 128
    %546 = vxpose.xlu0.b32.cont [12/16] 0.0, 128
    %547 = vxpose.xlu0.b32.cont [13/16] 0.0, 128
    %548 = vxpose.xlu0.b32.cont [14/16] 0.0, 128
    %549 = vxpose.xlu0.b32.cont [15/16] 0.0, 128
    %550 = vxpose.xlu0.b32.end [16/16] 0.0, 128
    %v551 = vpop.trf.xlu0
    %v552 = vpop.trf.xlu0
    %v553 = vpop.trf.xlu0
    %v554 = vpop.trf.xlu0
    %v555 = vpop.trf.xlu0
    %v556 = vpop.trf.xlu0
    %v557 = vpop.trf.xlu0
    %v558 = vpop.trf.xlu0
    %v559 = vpop.trf.xlu0
    %v560 = vpop.trf.xlu0
    %v561 = vpop.trf.xlu0
    %v562 = vpop.trf.xlu0
    %v563 = vpop.trf.xlu0
    %v564 = vpop.trf.xlu0
    %v565 = vpop.trf.xlu0
    %v566 = vpop.trf.xlu0
    %v568 = vsel %vm156, %v551, 0
    %570 = vmatprep.subr.mxu0 0.0
    %571 = vmatpush1.msra.mxu0 %v498
    %572 = vmatprep.subr.mxu0 0.0
    %573 = vmatpush1.msra.mxu0 %v499
    %574 = vmatprep.subr.mxu0 0.0
    %575 = vmatpush1.msra.mxu0 %v500
    %576 = vmatprep.subr.mxu0 0.0
    %577 = vmatpush1.msra.mxu0 %v501
    %578 = vmatprep.subr.mxu0 0.0
    %579 = vmatpush1.msra.mxu0 %v502
    %580 = vmatprep.subr.mxu0 0.0
    %581 = vmatpush1.msra.mxu0 %v503
    %582 = vmatprep.subr.mxu0 0.0
    %583 = vmatpush1.msra.mxu0 %v504
    %584 = vmatprep.subr.mxu0 0.0
    %585 = vmatpush1.msra.mxu0 %v505
    %586 = vmatprep.subr.mxu0 0.0
    %587 = vmatpush1.msra.mxu0 0.0
    %588 = vmatprep.subr.mxu0 0.0
    %589 = vmatpush1.msra.mxu0 0.0
    %590 = vmatprep.subr.mxu0 0.0
    %591 = vmatpush1.msra.mxu0 0.0
    %592 = vmatprep.subr.mxu0 0.0
    %593 = vmatpush1.msra.mxu0 0.0
    %594 = vmatprep.subr.mxu0 0.0
    %595 = vmatpush1.msra.mxu0 0.0
    %596 = vmatprep.subr.mxu0 0.0
    %597 = vmatpush1.msra.mxu0 0.0
    %598 = vmatprep.subr.mxu0 0.0
    %599 = vmatpush1.msra.mxu0 0.0
    %600 = vmatprep.subr.mxu0 0.0
    %601 = vmatpush1.msra.mxu0 0.0
    %602 = vmatprep.subr.mxu0 0.0
    %603 = vmatpush1.msra.mxu0 0.0
    %604 = vmatprep.subr.mxu0 0.0
    %605 = vmatpush1.msra.mxu0 0.0
    %606 = vmatprep.subr.mxu0 0.0
    %607 = vmatpush1.msra.mxu0 0.0
    %608 = vmatprep.subr.mxu0 0.0
    %609 = vmatpush1.msra.mxu0 0.0
    %610 = vmatprep.subr.mxu0 0.0
    %611 = vmatpush1.msra.mxu0 0.0
    %612 = vmatprep.subr.mxu0 0.0
    %613 = vmatpush1.msra.mxu0 0.0
    %614 = vmatprep.subr.mxu0 0.0
    %615 = vmatpush1.msra.mxu0 0.0
    %616 = vmatprep.subr.mxu0 0.0
    %617 = vmatpush1.msra.mxu0 0.0
    %618 = vmatprep.subr.mxu0 0.0
    %619 = vmatpush1.msra.mxu0 0.0
    %620 = vmatprep.subr.mxu0 0.0
    %621 = vmatpush1.msra.mxu0 0.0
    %622 = vmatprep.subr.mxu0 0.0
    %623 = vmatpush1.msra.mxu0 0.0
    %624 = vmatprep.subr.mxu0 0.0
    %625 = vmatpush1.msra.mxu0 0.0
    %626 = vmatprep.subr.mxu0 0.0
    %627 = vmatpush1.msra.mxu0 0.0
    %628 = vmatprep.subr.mxu0 0.0
    %629 = vmatpush1.msra.mxu0 0.0
    %630 = vmatprep.subr.mxu0 0.0
    %631 = vmatpush1.msra.mxu0 0.0
    %632 = vmatprep.subr.mxu0 0.0
    %633 = vmatpush1.msra.mxu0 0.0
    %634 = vmatprep.mubr.f32.mxu0 0.0
    %635 = vmatmul.mubr.f32.gmra.mrb[0].mxu0 %v568
    %v636 = vpop.f32.mrb[0].mxu0
    %v637 = vadd.f32 0.0, %v636
    %v638 = vpop.f32.mrb[0].mxu0
    %639 = vdwg.mxu0
    %v640 = vmul.f32 %v534, %v266
    %v641 = vsub.f32 %v637, %v640
    %v642 = vmul.f32 %v641, %v641
    %v643 = vsel %vm267, %v642, 0.0
    %v644 = vrot.slane %v643, 4
    %v645 = vadd.f32 %v643, %v644
    %v646 = vrot.slane %v645, 2
    %v647 = vadd.f32 %v645, %v646
    %v648 = vrot.slane %v647, 1
    %v649 = vadd.f32 %v647, %v648
    %v650 = vmax.f32 %v649, 1e-24
    %v651 = vrsqrt.pop %v650
    %v652 = vmul.f32 %v641, %v651
    %vm653 = vcmask 122880
    %654 = vst.msk [vmem:[#allocation4] sm:$0x1] %vm653, %v652
    %656 = vrot.lane.b32.xlu0 %v652, 16
    %v657 = vpop.permute.xlu0 %656
    %vm659 = vcmask 255105
    %660 = vst.msk [vmem:[#allocation4 - $0x1] sm:$0x2] %vm659, %v657
    %661 = vrot.lane.b32.xlu0 %v652, 32
    %v662 = vpop.permute.xlu0 %661
    %vm664 = vcmask 387330
    %665 = vst.msk [vmem:[#allocation4 - $0x2] sm:$0x4] %vm664, %v662
    %666 = vrot.lane.b32.xlu0 %v652, 48
    %v667 = vpop.permute.xlu0 %666
    %vm669 = vcmask 519555
    %670 = vst.msk [vmem:[#allocation4 - $0x3] sm:$0x8] %vm669, %v667
    %671 = vrot.lane.b32.xlu0 %v652, 64
    %v672 = vpop.permute.xlu0 %671
    %vm674 = vcmask 651780
    %675 = vst.msk [vmem:[#allocation4 - $0x4] sm:$0x10] %vm674, %v672
    %676 = vrot.lane.b32.xlu0 %v652, 80
    %v677 = vpop.permute.xlu0 %676
    %vm679 = vcmask 784005
    %680 = vst.msk [vmem:[#allocation4 - $0x5] sm:$0x20] %vm679, %v677
    %681 = vrot.lane.b32.xlu0 %v652, 96
    %v682 = vpop.permute.xlu0 %681
    %vm684 = vcmask 916230
    %685 = vst.msk [vmem:[#allocation4 - $0x6] sm:$0x40] %vm684, %v682
    %686 = vrot.lane.b32.xlu0 %v652, 112
    %v687 = vpop.permute.xlu0 %686
    %vm689 = vcmask 1048455
    %690 = vst.msk [vmem:[#allocation4 - $0x7] sm:$0x80] %vm689, %v687
    %v691 = vsel %vm267, %v236, -inf
    %692 = vmax.xlane.f32.xlu0 %v691
    %v693 = vpop.xlane.xlu0 %692
    %v694 = vsub.f32 %v236, %v693
    %v695 = vmul.f32 %v694, 1.442695
    %v696 = vpow.pop %v695
    %v697 = vsel %vm267, %v696, 0.0
    %698 = vadd.xlane.f32.xlu0 %v697
    %v699 = vpop.xlane.xlu0 %698
    %v700 = vrcp.pop %v699
    %v701 = vmul.f32 %v696, %v700
    %703 = vset.pattern.permute.xlu0 0
    %704 = vperm.xlu0 %703, %v265
    %v705 = vpop.permute.xlu0 %704
    %v707 = vmul.f32 %v701, %v705
    %708 = vst.msk [vmem:[#allocation2] sm:$0xff] %vm267, %v707
    %709 = vst.msk [vmem:[#allocation3] sm:$0xff] %vm286, %v125
    %v710 = vsel %vm288, %v236, -inf
    %711 = vmax.xlane.f32.xlu0 %v710
    %v712 = vpop.xlane.xlu0 %711
    %v713 = vsub.f32 %v236, %v712
    %v714 = vmul.f32 %v713, 1.442695
    %v715 = vpow.pop %v714
    %717 = vrot.lane.b32.xlu0 %v715, 112
    %v718 = vpop.permute.xlu0 %717
    %v720 = vsel %vm267, %v718, 0.0
    %721 = vadd.xlane.f32.xlu0 %v720
    %v722 = vpop.xlane.xlu0 %721
    %v723 = vrcp.pop %v722
    %v724 = vmul.f32 %v715, %v723
    %725 = vset.pattern.permute.xlu0 1
    %726 = vperm.xlu0 %725, %v265
    %v727 = vpop.permute.xlu0 %726
    %v729 = vmul.f32 %v724, %v727
    %731 = vrot.lane.b32.xlu0 %v729, 112
    %v732 = vpop.permute.xlu0 %731
    %734 = vst.msk [vmem:[#allocation2 + $0x8] sm:$0xff] %vm267, %v732
    %735 = vrot.lane.b32.xlu0 %v125, 120
    %v736 = vpop.permute.xlu0 %735
    %738 = vst.msk [vmem:[#allocation3 + $0x8] sm:$0xff] %vm286, %v736
    %v739 = vsel %vm318, %v236, -inf
    %740 = vmax.xlane.f32.xlu0 %v739
    %v741 = vpop.xlane.xlu0 %740
    %v742 = vsub.f32 %v236, %v741
    %v743 = vmul.f32 %v742, 1.442695
    %v744 = vpow.pop %v743
    %746 = vrot.lane.b32.xlu0 %v744, 96
    %v747 = vpop.permute.xlu0 %746
    %v749 = vsel %vm267, %v747, 0.0
    %750 = vadd.xlane.f32.xlu0 %v749
    %v751 = vpop.xlane.xlu0 %750
    %v752 = vrcp.pop %v751
    %v753 = vmul.f32 %v744, %v752
    %754 = vset.pattern.permute.xlu0 2
    %755 = vperm.xlu0 %754, %v265
    %v756 = vpop.permute.xlu0 %755
    %v758 = vmul.f32 %v753, %v756
    %760 = vrot.lane.b32.xlu0 %v758, 96
    %v761 = vpop.permute.xlu0 %760
    %763 = vst.msk [vmem:[#allocation2 + $0x10] sm:$0xff] %vm267, %v761
    %764 = vrot.lane.b32.xlu0 %v125, 112
    %v765 = vpop.permute.xlu0 %764
    %767 = vst.msk [vmem:[#allocation3 + $0x10] sm:$0xff] %vm286, %v765
    %v768 = vsel %vm348, %v236, -inf
    %769 = vmax.xlane.f32.xlu0 %v768
    %v770 = vpop.xlane.xlu0 %769
    %v771 = vsub.f32 %v236, %v770
    %v772 = vmul.f32 %v771, 1.442695
    %v773 = vpow.pop %v772
    %775 = vrot.lane.b32.xlu0 %v773, 80
    %v776 = vpop.permute.xlu0 %775
    %v778 = vsel %vm267, %v776, 0.0
    %779 = vadd.xlane.f32.xlu0 %v778
    %v780 = vpop.xlane.xlu0 %779
    %v781 = vrcp.pop %v780
    %v782 = vmul.f32 %v773, %v781
    %783 = vset.pattern.permute.xlu0 3
    %784 = vperm.xlu0 %783, %v265
    %v785 = vpop.permute.xlu0 %784
    %v787 = vmul.f32 %v782, %v785
    %789 = vrot.lane.b32.xlu0 %v787, 80
    %v790 = vpop.permute.xlu0 %789
    %792 = vst.msk [vmem:[#allocation2 + $0x18] sm:$0xff] %vm267, %v790
    %793 = vrot.lane.b32.xlu0 %v125, 104
    %v794 = vpop.permute.xlu0 %793
    %796 = vst.msk [vmem:[#allocation3 + $0x18] sm:$0xff] %vm286, %v794
    %v797 = vsel %vm378, %v236, -inf
    %798 = vmax.xlane.f32.xlu0 %v797
    %v799 = vpop.xlane.xlu0 %798
    %v800 = vsub.f32 %v236, %v799
    %v801 = vmul.f32 %v800, 1.442695
    %v802 = vpow.pop %v801
    %804 = vrot.lane.b32.xlu0 %v802, 64
    %v805 = vpop.permute.xlu0 %804
    %v807 = vsel %vm267, %v805, 0.0
    %808 = vadd.xlane.f32.xlu0 %v807
    %v809 = vpop.xlane.xlu0 %808
    %v810 = vrcp.pop %v809
    %v811 = vmul.f32 %v802, %v810
    %812 = vset.pattern.permute.xlu0 4
    %813 = vperm.xlu0 %812, %v265
    %v814 = vpop.permute.xlu0 %813
    %v816 = vmul.f32 %v811, %v814
    %818 = vrot.lane.b32.xlu0 %v816, 64
    %v819 = vpop.permute.xlu0 %818
    %821 = vst.msk [vmem:[#allocation2 + $0x20] sm:$0xff] %vm267, %v819
    %822 = vrot.lane.b32.xlu0 %v125, 96
    %v823 = vpop.permute.xlu0 %822
    %825 = vst.msk [vmem:[#allocation3 + $0x20] sm:$0xff] %vm286, %v823
    %v826 = vsel %vm408, %v236, -inf
    %827 = vmax.xlane.f32.xlu0 %v826
    %v828 = vpop.xlane.xlu0 %827
    %v829 = vsub.f32 %v236, %v828
    %v830 = vmul.f32 %v829, 1.442695
    %v831 = vpow.pop %v830
    %833 = vrot.lane.b32.xlu0 %v831, 48
    %v834 = vpop.permute.xlu0 %833
    %v836 = vsel %vm267, %v834, 0.0
    %837 = vadd.xlane.f32.xlu0 %v836
    %v838 = vpop.xlane.xlu0 %837
    %v839 = vrcp.pop %v838
    %v840 = vmul.f32 %v831, %v839
    %841 = vset.pattern.permute.xlu0 5
    %842 = vperm.xlu0 %841, %v265
    %v843 = vpop.permute.xlu0 %842
    %v845 = vmul.f32 %v840, %v843
    %847 = vrot.lane.b32.xlu0 %v845, 48
    %v848 = vpop.permute.xlu0 %847
    %850 = vst.msk [vmem:[#allocation2 + $0x28] sm:$0xff] %vm267, %v848
    %851 = vrot.lane.b32.xlu0 %v125, 88
    %v852 = vpop.permute.xlu0 %851
    %854 = vst.msk [vmem:[#allocation3 + $0x28] sm:$0xff] %vm286, %v852
    %v855 = vsel %vm438, %v236, -inf
    %856 = vmax.xlane.f32.xlu0 %v855
    %v857 = vpop.xlane.xlu0 %856
    %v858 = vsub.f32 %v236, %v857
    %v859 = vmul.f32 %v858, 1.442695
    %v860 = vpow.pop %v859
    %862 = vrot.lane.b32.xlu0 %v860, 32
    %v863 = vpop.permute.xlu0 %862
    %v865 = vsel %vm267, %v863, 0.0
    %866 = vadd.xlane.f32.xlu0 %v865
    %v867 = vpop.xlane.xlu0 %866
    %v868 = vrcp.pop %v867
    %v869 = vmul.f32 %v860, %v868
    %870 = vset.pattern.permute.xlu0 6
    %871 = vperm.xlu0 %870, %v265
    %v872 = vpop.permute.xlu0 %871
    %v874 = vmul.f32 %v869, %v872
    %876 = vrot.lane.b32.xlu0 %v874, 32
    %v877 = vpop.permute.xlu0 %876
    %879 = vst.msk [vmem:[#allocation2 + $0x30] sm:$0xff] %vm267, %v877
    %880 = vrot.lane.b32.xlu0 %v125, 80
    %v881 = vpop.permute.xlu0 %880
    %883 = vst.msk [vmem:[#allocation3 + $0x30] sm:$0xff] %vm286, %v881
    %v884 = vsel %vm468, %v236, -inf
    %885 = vmax.xlane.f32.xlu0 %v884
    %v886 = vpop.xlane.xlu0 %885
    %v887 = vsub.f32 %v236, %v886
    %v888 = vmul.f32 %v887, 1.442695
    %v889 = vpow.pop %v888
    %891 = vrot.lane.b32.xlu0 %v889, 16
    %v892 = vpop.permute.xlu0 %891
    %v894 = vsel %vm267, %v892, 0.0
    %895 = vadd.xlane.f32.xlu0 %v894
    %v896 = vpop.xlane.xlu0 %895
    %v897 = vrcp.pop %v896
    %v898 = vmul.f32 %v889, %v897
    %899 = vset.pattern.permute.xlu0 7
    %900 = vperm.xlu0 %899, %v265
    %v901 = vpop.permute.xlu0 %900
    %v903 = vmul.f32 %v898, %v901
    %905 = vrot.lane.b32.xlu0 %v903, 16
    %v906 = vpop.permute.xlu0 %905
    %908 = vst.msk [vmem:[#allocation2 + $0x38] sm:$0xff] %vm267, %v906
    %909 = vrot.lane.b32.xlu0 %v125, 72
    %v910 = vpop.permute.xlu0 %909
    %912 = vst.msk [vmem:[#allocation3 + $0x38] sm:$0xff] %vm286, %v910
    %v913 = vld [vmem:[#allocation2] sm:$0xff]
    %v914 = vld [vmem:[#allocation2 + $0x8] sm:$0xff]
    %v915 = vld [vmem:[#allocation2 + $0x10] sm:$0xff]
    %v916 = vld [vmem:[#allocation2 + $0x18] sm:$0xff]
    %v917 = vld [vmem:[#allocation2 + $0x20] sm:$0xff]
    %v918 = vld [vmem:[#allocation2 + $0x28] sm:$0xff]
    %v919 = vld [vmem:[#allocation2 + $0x30] sm:$0xff]
    %v920 = vld [vmem:[#allocation2 + $0x38] sm:$0xff]
    %v921 = vld [vmem:[#allocation3] sm:$0xff]
    %v922 = vld [vmem:[#allocation3 + $0x8] sm:$0xff]
    %v923 = vld [vmem:[#allocation3 + $0x10] sm:$0xff]
    %v924 = vld [vmem:[#allocation3 + $0x18] sm:$0xff]
    %v925 = vld [vmem:[#allocation3 + $0x20] sm:$0xff]
    %v926 = vld [vmem:[#allocation3 + $0x28] sm:$0xff]
    %v927 = vld [vmem:[#allocation3 + $0x30] sm:$0xff]
    %v928 = vld [vmem:[#allocation3 + $0x38] sm:$0xff]
    %v929 = vsel %vm267, %v913, 0.0
    %v930 = vsel %vm267, %v914, 0.0
    %v931 = vadd.f32 %v929, %v930
    %v932 = vsel %vm267, %v915, 0.0
    %v933 = vadd.f32 %v931, %v932
    %v934 = vsel %vm267, %v916, 0.0
    %v935 = vadd.f32 %v933, %v934
    %v936 = vsel %vm267, %v917, 0.0
    %v937 = vadd.f32 %v935, %v936
    %v938 = vsel %vm267, %v918, 0.0
    %v939 = vadd.f32 %v937, %v938
    %v940 = vsel %vm267, %v919, 0.0
    %v941 = vadd.f32 %v939, %v940
    %v942 = vsel %vm267, %v920, 0.0
    %v943 = vadd.f32 %v941, %v942
    %v944 = vrot.slane %v943, 4
    %v945 = vadd.f32 %v943, %v944
    %v946 = vrot.slane %v945, 2
    %v947 = vadd.f32 %v945, %v946
    %v948 = vrot.slane %v947, 1
    %v949 = vadd.f32 %v947, %v948
    %950 = vxpose.xlu0.b32.start [1/16] %v921, 128
    %951 = vxpose.xlu0.b32.cont [2/16] %v922, 128
    %952 = vxpose.xlu0.b32.cont [3/16] %v923, 128
    %953 = vxpose.xlu0.b32.cont [4/16] %v924, 128
    %954 = vxpose.xlu0.b32.cont [5/16] %v925, 128
    %955 = vxpose.xlu0.b32.cont [6/16] %v926, 128
    %956 = vxpose.xlu0.b32.cont [7/16] %v927, 128
    %957 = vxpose.xlu0.b32.cont [8/16] %v928, 128
    %958 = vxpose.xlu0.b32.cont [9/16] 0.0, 128
    %959 = vxpose.xlu0.b32.cont [10/16] 0.0, 128
    %960 = vxpose.xlu0.b32.cont [11/16] 0.0, 128
    %961 = vxpose.xlu0.b32.cont [12/16] 0.0, 128
    %962 = vxpose.xlu0.b32.cont [13/16] 0.0, 128
    %963 = vxpose.xlu0.b32.cont [14/16] 0.0, 128
    %964 = vxpose.xlu0.b32.cont [15/16] 0.0, 128
    %965 = vxpose.xlu0.b32.end [16/16] 0.0, 128
    %v966 = vpop.trf.xlu0
    %v967 = vpop.trf.xlu0
    %v968 = vpop.trf.xlu0
    %v969 = vpop.trf.xlu0
    %v970 = vpop.trf.xlu0
    %v971 = vpop.trf.xlu0
    %v972 = vpop.trf.xlu0
    %v973 = vpop.trf.xlu0
    %v974 = vpop.trf.xlu0
    %v975 = vpop.trf.xlu0
    %v976 = vpop.trf.xlu0
    %v977 = vpop.trf.xlu0
    %v978 = vpop.trf.xlu0
    %v979 = vpop.trf.xlu0
    %v980 = vpop.trf.xlu0
    %v981 = vpop.trf.xlu0
    %v983 = vsel %vm156, %v966, 0
    %985 = vmatprep.subr.mxu0 0.0
    %986 = vmatpush1.msra.mxu0 %v913
    %987 = vmatprep.subr.mxu0 0.0
    %988 = vmatpush1.msra.mxu0 %v914
    %989 = vmatprep.subr.mxu0 0.0
    %990 = vmatpush1.msra.mxu0 %v915
    %991 = vmatprep.subr.mxu0 0.0
    %992 = vmatpush1.msra.mxu0 %v916
    %993 = vmatprep.subr.mxu0 0.0
    %994 = vmatpush1.msra.mxu0 %v917
    %995 = vmatprep.subr.mxu0 0.0
    %996 = vmatpush1.msra.mxu0 %v918
    %997 = vmatprep.subr.mxu0 0.0
    %998 = vmatpush1.msra.mxu0 %v919
    %999 = vmatprep.subr.mxu0 0.0
    %1000 = vmatpush1.msra.mxu0 %v920
    %1001 = vmatprep.subr.mxu0 0.0
    %1002 = vmatpush1.msra.mxu0 0.0
    %1003 = vmatprep.subr.mxu0 0.0
    %1004 = vmatpush1.msra.mxu0 0.0
    %1005 = vmatprep.subr.mxu0 0.0
    %1006 = vmatpush1.msra.mxu0 0.0
    %1007 = vmatprep.subr.mxu0 0.0
    %1008 = vmatpush1.msra.mxu0 0.0
    %1009 = vmatprep.subr.mxu0 0.0
    %1010 = vmatpush1.msra.mxu0 0.0
    %1011 = vmatprep.subr.mxu0 0.0
    %1012 = vmatpush1.msra.mxu0 0.0
    %1013 = vmatprep.subr.mxu0 0.0
    %1014 = vmatpush1.msra.mxu0 0.0
    %1015 = vmatprep.subr.mxu0 0.0
    %1016 = vmatpush1.msra.mxu0 0.0
    %1017 = vmatprep.subr.mxu0 0.0
    %1018 = vmatpush1.msra.mxu0 0.0
    %1019 = vmatprep.subr.mxu0 0.0
    %1020 = vmatpush1.msra.mxu0 0.0
    %1021 = vmatprep.subr.mxu0 0.0
    %1022 = vmatpush1.msra.mxu0 0.0
    %1023 = vmatprep.subr.mxu0 0.0
    %1024 = vmatpush1.msra.mxu0 0.0
    %1025 = vmatprep.subr.mxu0 0.0
    %1026 = vmatpush1.msra.mxu0 0.0
    %1027 = vmatprep.subr.mxu0 0.0
    %1028 = vmatpush1.msra.mxu0 0.0
    %1029 = vmatprep.subr.mxu0 0.0
    %1030 = vmatpush1.msra.mxu0 0.0
    %1031 = vmatprep.subr.mxu0 0.0
    %1032 = vmatpush1.msra.mxu0 0.0
    %1033 = vmatprep.subr.mxu0 0.0
    %1034 = vmatpush1.msra.mxu0 0.0
    %1035 = vmatprep.subr.mxu0 0.0
    %1036 = vmatpush1.msra.mxu0 0.0
    %1037 = vmatprep.subr.mxu0 0.0
    %1038 = vmatpush1.msra.mxu0 0.0
    %1039 = vmatprep.subr.mxu0 0.0
    %1040 = vmatpush1.msra.mxu0 0.0
    %1041 = vmatprep.subr.mxu0 0.0
    %1042 = vmatpush1.msra.mxu0 0.0
    %1043 = vmatprep.subr.mxu0 0.0
    %1044 = vmatpush1.msra.mxu0 0.0
    %1045 = vmatprep.subr.mxu0 0.0
    %1046 = vmatpush1.msra.mxu0 0.0
    %1047 = vmatprep.subr.mxu0 0.0
    %1048 = vmatpush1.msra.mxu0 0.0
    %1049 = vmatprep.mubr.f32.mxu0 0.0
    %1050 = vmatmul.mubr.f32.gmra.mrb[0].mxu0 %v983
    %v1051 = vpop.f32.mrb[0].mxu0
    %v1052 = vadd.f32 0.0, %v1051
    %v1053 = vpop.f32.mrb[0].mxu0
    %1054 = vdwg.mxu0
    %v1055 = vmul.f32 %v949, %v266
    %v1056 = vsub.f32 %v1052, %v1055
    %v1057 = vmul.f32 %v1056, %v1056
    %v1058 = vsel %vm267, %v1057, 0.0
    %v1059 = vrot.slane %v1058, 4
    %v1060 = vadd.f32 %v1058, %v1059
    %v1061 = vrot.slane %v1060, 2
    %v1062 = vadd.f32 %v1060, %v1061
    %v1063 = vrot.slane %v1062, 1
    %v1064 = vadd.f32 %v1062, %v1063
    %v1065 = vmax.f32 %v1064, 1e-24
    %v1066 = vrsqrt.pop %v1065
    %v1067 = vmul.f32 %v1056, %v1066
    %1068 = vst.msk [vmem:[#allocation4 + $0x1] sm:$0x1] %vm653, %v1067
    %1070 = vrot.lane.b32.xlu0 %v1067, 16
    %v1071 = vpop.permute.xlu0 %1070
    %1073 = vst.msk [vmem:[#allocation4] sm:$0x2] %vm659, %v1071
    %1074 = vrot.lane.b32.xlu0 %v1067, 32
    %v1075 = vpop.permute.xlu0 %1074
    %1077 = vst.msk [vmem:[#allocation4 - $0x1] sm:$0x4] %vm664, %v1075
    %1078 = vrot.lane.b32.xlu0 %v1067, 48
    %v1079 = vpop.permute.xlu0 %1078
    %1081 = vst.msk [vmem:[#allocation4 - $0x2] sm:$0x8] %vm669, %v1079
    %1082 = vrot.lane.b32.xlu0 %v1067, 64
    %v1083 = vpop.permute.xlu0 %1082
    %1085 = vst.msk [vmem:[#allocation4 - $0x3] sm:$0x10] %vm674, %v1083
    %1086 = vrot.lane.b32.xlu0 %v1067, 80
    %v1087 = vpop.permute.xlu0 %1086
    %1089 = vst.msk [vmem:[#allocation4 - $0x4] sm:$0x20] %vm679, %v1087
    %1090 = vrot.lane.b32.xlu0 %v1067, 96
    %v1091 = vpop.permute.xlu0 %1090
    %1093 = vst.msk [vmem:[#allocation4 - $0x5] sm:$0x40] %vm684, %v1091
    %1094 = vrot.lane.b32.xlu0 %v1067, 112
    %v1095 = vpop.permute.xlu0 %1094
    %1097 = vst.msk [vmem:[#allocation4 - $0x6] sm:$0x80] %vm689, %v1095
    %v1098 = vld [vmem:[#allocation4] sm:$0x3]
    %v1099 = vld [vmem:[%s7] sm:$0xff]
    %v1100 = vld [vmem:[%s7 + $0x8] sm:$0xff]
    %v1101 = vld [vmem:[%s7 + $0x10] sm:$0xff]
    %v1102 = vld [vmem:[%s7 + $0x18] sm:$0xff]
    %v1103 = vld [vmem:[%s7 + $0x20] sm:$0xff]
    %v1104 = vld [vmem:[%s7 + $0x28] sm:$0xff]
    %v1105 = vld [vmem:[%s7 + $0x30] sm:$0xff]
    %v1106 = vld [vmem:[%s7 + $0x38] sm:$0xff]
    %v1107 = vld [vmem:[%s7 + $0x40] sm:$0xff]
    %v1108 = vld [vmem:[%s7 + $0x48] sm:$0xff]
    %v1109 = vld [vmem:[%s7 + $0x50] sm:$0xff]
    %v1110 = vld [vmem:[%s7 + $0x58] sm:$0xff]
    %v1111 = vld [vmem:[%s7 + $0x60] sm:$0xff]
    %v1112 = vld [vmem:[%s7 + $0x68] sm:$0xff]
    %v1113 = vld [vmem:[%s7 + $0x70] sm:$0xff]
    %v1114 = vld [vmem:[%s7 + $0x78] sm:$0xff]
    %v1115 = vld [vmem:[%s8] sm:$0x1]
    %v1117 = vlaneseq
    %v1118 = vshrl.u32 %v1117, 7
    %v1119 = vsub.s32 0, %v1118
    %v1120 = vrot.slane %v1115, %v1119
    %1122 = vmatprep.subr.mxu0 0.0
    %1123 = vmatpush1.msra.mxu0 %v1099
    %1124 = vmatprep.subr.mxu0 0.0
    %1125 = vmatpush1.msra.mxu0 %v1100
    %1126 = vmatprep.subr.mxu0 0.0
    %1127 = vmatpush1.msra.mxu0 %v1101
    %1128 = vmatprep.subr.mxu0 0.0
    %1129 = vmatpush1.msra.mxu0 %v1102
    %1130 = vmatprep.subr.mxu0 0.0
    %1131 = vmatpush1.msra.mxu0 %v1103
    %1132 = vmatprep.subr.mxu0 0.0
    %1133 = vmatpush1.msra.mxu0 %v1104
    %1134 = vmatprep.subr.mxu0 0.0
    %1135 = vmatpush1.msra.mxu0 %v1105
    %1136 = vmatprep.subr.mxu0 0.0
    %1137 = vmatpush1.msra.mxu0 %v1106
    %1138 = vmatprep.subr.mxu0 0.0
    %1139 = vmatpush1.msra.mxu0 %v1107
    %1140 = vmatprep.subr.mxu0 0.0
    %1141 = vmatpush1.msra.mxu0 %v1108
    %1142 = vmatprep.subr.mxu0 0.0
    %1143 = vmatpush1.msra.mxu0 %v1109
    %1144 = vmatprep.subr.mxu0 0.0
    %1145 = vmatpush1.msra.mxu0 %v1110
    %1146 = vmatprep.subr.mxu0 0.0
    %1147 = vmatpush1.msra.mxu0 %v1111
    %1148 = vmatprep.subr.mxu0 0.0
    %1149 = vmatpush1.msra.mxu0 %v1112
    %1150 = vmatprep.subr.mxu0 0.0
    %1151 = vmatpush1.msra.mxu0 %v1113
    %1152 = vmatprep.subr.mxu0 0.0
    %1153 = vmatpush1.msra.mxu0 %v1114
    %1154 = vmatprep.subr.mxu0 0.0
    %1155 = vmatpush1.msra.mxu0 0.0
    %1156 = vmatprep.subr.mxu0 0.0
    %1157 = vmatpush1.msra.mxu0 0.0
    %1158 = vmatprep.subr.mxu0 0.0
    %1159 = vmatpush1.msra.mxu0 0.0
    %1160 = vmatprep.subr.mxu0 0.0
    %1161 = vmatpush1.msra.mxu0 0.0
    %1162 = vmatprep.subr.mxu0 0.0
    %1163 = vmatpush1.msra.mxu0 0.0
    %1164 = vmatprep.subr.mxu0 0.0
    %1165 = vmatpush1.msra.mxu0 0.0
    %1166 = vmatprep.subr.mxu0 0.0
    %1167 = vmatpush1.msra.mxu0 0.0
    %1168 = vmatprep.subr.mxu0 0.0
    %1169 = vmatpush1.msra.mxu0 0.0
    %1170 = vmatprep.subr.mxu0 0.0
    %1171 = vmatpush1.msra.mxu0 0.0
    %1172 = vmatprep.subr.mxu0 0.0
    %1173 = vmatpush1.msra.mxu0 0.0
    %1174 = vmatprep.subr.mxu0 0.0
    %1175 = vmatpush1.msra.mxu0 0.0
    %1176 = vmatprep.subr.mxu0 0.0
    %1177 = vmatpush1.msra.mxu0 0.0
    %1178 = vmatprep.subr.mxu0 0.0
    %1179 = vmatpush1.msra.mxu0 0.0
    %1180 = vmatprep.subr.mxu0 0.0
    %1181 = vmatpush1.msra.mxu0 0.0
    %1182 = vmatprep.subr.mxu0 0.0
    %1183 = vmatpush1.msra.mxu0 0.0
    %1184 = vmatprep.subr.mxu0 0.0
    %1185 = vmatpush1.msra.mxu0 0.0
    %1186 = vmatprep.mubr.f32.mxu0 0.0
    %1187 = vmatmul.mubr.f32.gmra.mrb[0].mxu0 %v1098
    %v1188 = vpop.f32.mrb[0].mxu0
    %v1189 = vadd.f32 %v1120, %v1188
    %v1190 = vpop.f32.mrb[0].mxu0
    %1191 = vdwg.mxu0
    %vm1192 = vcmask 517120
    %1193 = vst.msk [vmem:[#allocation5] sm:$0x3] %vm1192, %v1189
    // Predicated region
    $region38: #{nextvlad_pallas.1} parent=1 // pred_check
      _
    $region39: #{nextvlad_pallas.1} parent=1 // pred_check_branch
      %1195 = sbr.rel (0) target = $region41
    $region40: #{nextvlad_pallas.1} parent=1 // pred_region
      %s1197 = ssub.s32 32, 32
      %1198 = vsyncadd [#allocation6], %s1197
      %s1200 = sshll.u32 [#allocation5], 4
      %s1201 = int_to_ptr.vmem [resolvable:$true] %s1200
      %1203 = dma.vmem_to_hbm [thread:$0]  %s1201, 32, %s9, [#allocation6]
    $region41: #{nextvlad_pallas.1} parent=1 // pred_fallthru
      _
    // Predicated region
    $region42: #{nextvlad_pallas.1} parent=1 // pred_check
      _
    $region43: #{nextvlad_pallas.1} parent=1 // pred_check_branch
      %1205 = sbr.rel (0) target = $region45
    $region44: #{nextvlad_pallas.1} parent=1 // pred_region
      %1206 = dma.done [#allocation6], 32
    $region45: #{nextvlad_pallas.1} parent=1 // pred_fallthru
      _
    %1207 = vsyncpa [#allocation6], 1

</llo_original>
